<compile_context>
chip_gen: v7x
topology: tpu7x:2x2x1
jax: 0.10.0
libtpu: 0.0.40
codegen_flags: <defaults>
</compile_context>

<pallas_src>
import functools

import jax
import jax.numpy as jnp
from jax import lax
from jax.experimental import pallas as pl
from jax.experimental.pallas import tpu as pltpu


# ----------------------------- shared recurrence -----------------------------

def _lstm_chunk(x_ref, wih_ref, whh_ref, b_ref, h_sc, c_sc, gx_sc, y_ref):
    """Run one time-chunk of the LSTM recurrence.

    Precomputes the input projection for the whole chunk as a single large matmul
    (fills the MXU), then carries only h @ Whh inside the (unrolled) time loop.
    Writes per-step hidden states to y_ref if it is not None.
    Returns (h, c) after the chunk and stores them back into the carry scratch.
    """
    Tc, Bt, D = x_ref.shape
    H = h_sc.shape[-1]

    # Hoisted input projection + bias broadcast: one (Tc*Bt, D) @ (D, 4H) matmul.
    gx = (jnp.dot(x_ref[...].reshape(Tc * Bt, D), wih_ref[...],
                  preferred_element_type=jnp.float32)
          + b_ref[...])                                       # (Tc*Bt, 4H)
    gx_sc[...] = gx.reshape(Tc, Bt, 4 * H)

    # Hoisted loop-invariant weight load.
    whh = whh_ref[...]                                        # (H, 4H)

    def step(t, carry):
        h, c = carry
        gates = gx_sc[t] + jnp.dot(h, whh, preferred_element_type=jnp.float32)  # (Bt, 4H)
        i = jax.nn.sigmoid(gates[:, 0 * H:1 * H])
        f = jax.nn.sigmoid(gates[:, 1 * H:2 * H])
        g = jnp.tanh(gates[:, 2 * H:3 * H])
        o = jax.nn.sigmoid(gates[:, 3 * H:4 * H])
        c_new = f * c + i * g
        h_new = o * jnp.tanh(c_new)
        if y_ref is not None:
            y_ref[pl.ds(t, 1)] = h_new[None]
        return h_new, c_new

    h, c = lax.fori_loop(0, Tc, step, (h_sc[...], c_sc[...]), unroll=True)
    h_sc[...] = h
    c_sc[...] = c
    return h, c


# ----------------------------- Pallas kernels ------------------------------

def lstm_mid_kernel(x_ref, wih_ref, whh_ref, b_ref, h0_ref, c0_ref,
                    y_ref, hT_ref, cT_ref,
                    h_sc, c_sc, gx_sc):
    """Non-final LSTM layer: emits the full sequence y plus (hT, cT)."""
    ti = pl.program_id(1)

    @pl.when(ti == 0)
    def _():
        h_sc[...] = h0_ref[...]
        c_sc[...] = c0_ref[...]

    h, c = _lstm_chunk(x_ref, wih_ref, whh_ref, b_ref, h_sc, c_sc, gx_sc, y_ref)

    @pl.when(ti == pl.num_programs(1) - 1)
    def _():
        hT_ref[...] = h
        cT_ref[...] = c


def lstm_last_kernel(x_ref, wih_ref, whh_ref, b_ref, h0_ref, c0_ref,
                     fcw_ref, fcb_ref,
                     out_ref, hT_ref, cT_ref,
                     h_sc, c_sc, gx_sc):
    """Final LSTM layer: no y output; FC + softmax head fused at the last step
    (h_last of the reference module is exactly hT of the last layer)."""
    ti = pl.program_id(1)

    @pl.when(ti == 0)
    def _():
        h_sc[...] = h0_ref[...]
        c_sc[...] = c0_ref[...]

    h, c = _lstm_chunk(x_ref, wih_ref, whh_ref, b_ref, h_sc, c_sc, gx_sc, None)

    @pl.when(ti == pl.num_programs(1) - 1)
    def _():
        hT_ref[...] = h
        cT_ref[...] = c
        logits = (jnp.dot(h, fcw_ref[...], preferred_element_type=jnp.float32)
                  + fcb_ref[...])                              # (Bt, O)
        m = jnp.max(logits, axis=-1, keepdims=True)
        e = jnp.exp(logits - m)
        out_ref[...] = e / jnp.sum(e, axis=-1, keepdims=True)


# ------------------------------ JAX wrappers --------------------------------

_COMPILER_PARAMS = pltpu.CompilerParams(
    dimension_semantics=("parallel", "arbitrary"),   # batch tiles || , time chunks seq.
    vmem_limit_bytes=32 * 1024 * 1024,               # safe on v5e/v6e/v7x for these tiles
)


def lstm_mid_layer(x_tm, wih_t, whh_t, b, h0, c0, *, t_chunk):
    T, B, D = x_tm.shape
    H = h0.shape[-1]
    Bt = B                          # one batch tile at these sizes; axis stays "parallel"
    grid = (B // Bt, T // t_chunk)
    return pl.pallas_call(
        lstm_mid_kernel,
        out_shape=(jax.ShapeDtypeStruct((T, B, H), jnp.float32),
                   jax.ShapeDtypeStruct((B, H), jnp.float32),
                   jax.ShapeDtypeStruct((B, H), jnp.float32)),
        grid_spec=pltpu.PrefetchScalarGridSpec(
            num_scalar_prefetch=0,
            grid=grid,
            in_specs=[
                pl.BlockSpec((t_chunk, Bt, D), lambda bi, ti: (ti, bi, 0)),   # x chunk
                pl.BlockSpec((D, 4 * H), lambda bi, ti: (0, 0)),              # Wih (resident)
                pl.BlockSpec((H, 4 * H), lambda bi, ti: (0, 0)),              # Whh (resident)
                pl.BlockSpec((1, 4 * H), lambda bi, ti: (0, 0)),              # bias
                pl.BlockSpec((Bt, H), lambda bi, ti: (bi, 0)),                # h0
                pl.BlockSpec((Bt, H), lambda bi, ti: (bi, 0)),                # c0
            ],
            out_specs=(
                pl.BlockSpec((t_chunk, Bt, H), lambda bi, ti: (ti, bi, 0)),   # y chunk
                pl.BlockSpec((Bt, H), lambda bi, ti: (bi, 0)),                # hT
                pl.BlockSpec((Bt, H), lambda bi, ti: (bi, 0)),                # cT
            ),
            scratch_shapes=[
                pltpu.VMEM((Bt, H), jnp.float32),                  # h carry
                pltpu.VMEM((Bt, H), jnp.float32),                  # c carry
                pltpu.VMEM((t_chunk, Bt, 4 * H), jnp.float32),     # precomputed X@Wih gates
            ],
        ),
        compiler_params=_COMPILER_PARAMS,
    )(x_tm, wih_t, whh_t, b, h0, c0)


def lstm_last_layer(x_tm, wih_t, whh_t, b, h0, c0, fc_w_t, fc_b, *, t_chunk):
    T, B, D = x_tm.shape
    H = h0.shape[-1]
    O = fc_w_t.shape[-1]
    Bt = B
    grid = (B // Bt, T // t_chunk)
    return pl.pallas_call(
        lstm_last_kernel,
        out_shape=(jax.ShapeDtypeStruct((B, O), jnp.float32),
                   jax.ShapeDtypeStruct((B, H), jnp.float32),
                   jax.ShapeDtypeStruct((B, H), jnp.float32)),
        grid_spec=pltpu.PrefetchScalarGridSpec(
            num_scalar_prefetch=0,
            grid=grid,
            in_specs=[
                pl.BlockSpec((t_chunk, Bt, D), lambda bi, ti: (ti, bi, 0)),   # x chunk
                pl.BlockSpec((D, 4 * H), lambda bi, ti: (0, 0)),              # Wih
                pl.BlockSpec((H, 4 * H), lambda bi, ti: (0, 0)),              # Whh
                pl.BlockSpec((1, 4 * H), lambda bi, ti: (0, 0)),              # bias
                pl.BlockSpec((Bt, H), lambda bi, ti: (bi, 0)),                # h0
                pl.BlockSpec((Bt, H), lambda bi, ti: (bi, 0)),                # c0
                pl.BlockSpec((H, O), lambda bi, ti: (0, 0)),                  # FC weight
                pl.BlockSpec((1, O), lambda bi, ti: (0, 0)),                  # FC bias
            ],
            out_specs=(
                pl.BlockSpec((Bt, O), lambda bi, ti: (bi, 0)),                # softmax out
                pl.BlockSpec((Bt, H), lambda bi, ti: (bi, 0)),                # hT
                pl.BlockSpec((Bt, H), lambda bi, ti: (bi, 0)),                # cT
            ),
            scratch_shapes=[
                pltpu.VMEM((Bt, H), jnp.float32),
                pltpu.VMEM((Bt, H), jnp.float32),
                pltpu.VMEM((t_chunk, Bt, 4 * H), jnp.float32),
            ],
        ),
        compiler_params=_COMPILER_PARAMS,
    )(x_tm, wih_t, whh_t, b, h0, c0, fc_w_t, fc_b)


def sentiment_rnn_forward(params, x_tokens, hidden, *, t_chunk=None):
    """Mirrors SentimentRNN.forward: returns (softmax_out, (h_n, c_n))."""
    h0_all, c0_all = hidden                             # each (n_layers, B, H)
    n_layers, B, H = h0_all.shape
    T = x_tokens.shape[1]

    # Embedding lookup (gather stays in plain JAX glue).
    embeds = jnp.take(params["embedding"], x_tokens, axis=0)   # (B, T, E)
    x = jnp.transpose(embeds, (1, 0, 2))                       # time-major (T, B, E)

    # Pad batch to a multiple of 8 (f32 sublanes) so vreg/stores are unmasked.
    B_pad = max(8, ((B + 7) // 8) * 8)
    pad_b = B_pad - B
    if pad_b:
        x = jnp.pad(x, ((0, 0), (0, pad_b), (0, 0)))
        h0_all = jnp.pad(h0_all, ((0, 0), (0, pad_b), (0, 0)))
        c0_all = jnp.pad(c0_all, ((0, 0), (0, pad_b), (0, 0)))

    if t_chunk is None:
        t_chunk = T if T <= 8 else 8
    assert T % t_chunk == 0  # TODO(synk): pad T for sequence lengths not divisible by chunk

    # Dropout with drop_prob=0.0 is the identity (matches the module default).
    layer_in = x
    h_n, c_n = [], []
    for l in range(n_layers - 1):
        y, hT, cT = lstm_mid_layer(layer_in,
                                   params["wih_t"][l], params["whh_t"][l], params["b"][l],
                                   h0_all[l], c0_all[l], t_chunk=t_chunk)
        layer_in = y
        h_n.append(hT)
        c_n.append(cT)

    # Last layer: FC + softmax fused, no (T, B, H) output materialized.
    out_p, hT, cT = lstm_last_layer(layer_in,
                                    params["wih_t"][-1], params["whh_t"][-1], params["b"][-1],
                                    h0_all[-1], c0_all[-1],
                                    params["fc_w_t"], params["fc_b"], t_chunk=t_chunk)
    h_n.append(hT)
    c_n.append(cT)

    out = out_p[:B]
    h_n = jnp.stack(h_n, axis=0)[:, :B]
    c_n = jnp.stack(c_n, axis=0)[:, :B]
    return out, (h_n, c_n)


# ------------------------------ Parameter init ------------------------------

def init_params(key, vocab, embedding_dim, hidden_dim, n_layers, output_size):
    keys = jax.random.split(key, 4 + 4 * n_layers)
    k = 1.0 / jnp.sqrt(hidden_dim)

    embedding = jax.random.normal(keys[0], (vocab, embedding_dim), jnp.float32)

    wih_t, whh_t, biases = [], [], []
    for l in range(n_layers):
        in_dim = embedding_dim if l == 0 else hidden_dim
        kw = keys[4 + 4 * l: 4 + 4 * (l + 1)]
        w_ih = jax.random.uniform(kw[0], (4 * hidden_dim, in_dim), jnp.float32, -k, k)
        w_hh = jax.random.uniform(kw[1], (4 * hidden_dim, hidden_dim), jnp.float32, -k, k)
        b_ih = jax.random.uniform(kw[2], (4 * hidden_dim,), jnp.float32, -k, k)
        b_hh = jax.random.uniform(kw[3], (4 * hidden_dim,), jnp.float32, -k, k)
        wih_t.append(w_ih.T)                             # (in_dim, 4H)
        whh_t.append(w_hh.T)                             # (H, 4H)
        biases.append((b_ih + b_hh)[None, :])            # (1, 4H)

    fc_w = jax.random.uniform(keys[1], (output_size, hidden_dim), jnp.float32, -k, k)
    fc_b = jax.random.uniform(keys[2], (output_size,), jnp.float32, -k, k)

    return {
        "embedding": embedding,
        "wih_t": wih_t,
        "whh_t": whh_t,
        "b": biases,
        "fc_w_t": fc_w.T,                                # (H, O)
        "fc_b": fc_b[None, :],                           # (1, O)
    }


# ------------------------------------ Main -----------------------------------

if __name__ == "__main__":
    vocab = 16
    embedding_dim = 32
    hidden_dim = 32
    n_layers = 2
    output_size = 2
    batch = 2
    seq = 8

    key = jax.random.PRNGKey(0)
    kp, kx = jax.random.split(key)

    params = init_params(kp, vocab, embedding_dim, hidden_dim, n_layers, output_size)

    x_tokens = jax.random.randint(kx, (batch, seq), 0, vocab, dtype=jnp.int32)
    hidden = (jnp.zeros((n_layers, batch, hidden_dim), jnp.float32),
              jnp.zeros((n_layers, batch, hidden_dim), jnp.float32))

    forward = jax.jit(functools.partial(sentiment_rnn_forward, t_chunk=4))
    out, (h_n, c_n) = forward(params, x_tokens, hidden)
    out = jax.block_until_ready(out)
    h_n = jax.block_until_ready(h_n)
    c_n = jax.block_until_ready(c_n)

    assert out.shape == (batch, output_size)
    assert h_n.shape == (n_layers, batch, hidden_dim)
    assert c_n.shape == (n_layers, batch, hidden_dim)
    assert bool(jnp.all(jnp.isfinite(out)))
    assert bool(jnp.allclose(jnp.sum(out, axis=-1), 1.0, atol=1e-5))
    print("KERNEL_OK")
</pallas_src>

<mosaic_0001>
module attributes {stable_mosaic.version = 11 : i64} {
  func.func @lstm_mid_kernel(%arg0: i32, %arg1: i32, %arg2: memref<4x8x32xf32, #tpu.memory_space<vmem>>, %arg3: memref<32x128xf32, #tpu.memory_space<vmem>>, %arg4: memref<32x128xf32, #tpu.memory_space<vmem>>, %arg5: memref<1x128xf32, #tpu.memory_space<vmem>>, %arg6: memref<8x32xf32, #tpu.memory_space<vmem>>, %arg7: memref<8x32xf32, #tpu.memory_space<vmem>>, %arg8: memref<4x8x32xf32, #tpu.memory_space<vmem>>, %arg9: memref<8x32xf32, #tpu.memory_space<vmem>>, %arg10: memref<8x32xf32, #tpu.memory_space<vmem>>, %arg11: memref<8x32xf32, #tpu.memory_space<vmem>>, %arg12: memref<8x32xf32, #tpu.memory_space<vmem>>, %arg13: memref<4x8x128xf32, #tpu.memory_space<vmem>>) attributes {dimension_semantics = [#tpu.dimension_semantics<parallel>, #tpu.dimension_semantics<arbitrary>], iteration_bounds = array<i64: 1, 2>, scalar_prefetch = 0 : i64, scratch_operands = 3 : i64, tpu.core_type = #tpu.core_type<tc>, window_params = [{transform_indices = @transform_0, window_bounds = array<i64: 4, 8, 32>}, {pipeline_mode = #tpu.pipeline_mode<synchronous>, transform_indices = @transform_1, window_bounds = array<i64: 32, 128>}, {pipeline_mode = #tpu.pipeline_mode<synchronous>, transform_indices = @transform_2, window_bounds = array<i64: 32, 128>}, {pipeline_mode = #tpu.pipeline_mode<synchronous>, transform_indices = @transform_3, window_bounds = array<i64: 1, 128>}, {transform_indices = @transform_4, window_bounds = array<i64: 8, 32>}, {transform_indices = @transform_5, window_bounds = array<i64: 8, 32>}, {transform_indices = @transform_6, window_bounds = array<i64: 4, 8, 32>}, {transform_indices = @transform_7, window_bounds = array<i64: 8, 32>}, {transform_indices = @transform_8, window_bounds = array<i64: 8, 32>}]} {
    %c0_i32 = arith.constant 0 : i32
    %0 = arith.cmpi eq, %arg1, %c0_i32 : i32
    %1 = arith.extui %0 : i1 to i32
    %c0_i32_0 = arith.constant 0 : i32
    %2 = arith.cmpi ne, %1, %c0_i32_0 : i32
    scf.if %2 {
      %c0_55 = arith.constant 0 : index
      %c0_56 = arith.constant 0 : index
      %152 = vector.load %arg6[%c0_55, %c0_56] : memref<8x32xf32, #tpu.memory_space<vmem>>, vector<8x32xf32>
      %c0_57 = arith.constant 0 : index
      %c0_58 = arith.constant 0 : index
      %153 = vector.load %arg11[%c0_57, %c0_58] : memref<8x32xf32, #tpu.memory_space<vmem>>, vector<8x32xf32>
      tpu.vector_store %arg11[%c0_57, %c0_58], %152 {strides = array<i32>} : memref<8x32xf32, #tpu.memory_space<vmem>>, vector<8x32xf32>,
      %c0_59 = arith.constant 0 : index
      %c0_60 = arith.constant 0 : index
      %154 = vector.load %arg7[%c0_59, %c0_60] : memref<8x32xf32, #tpu.memory_space<vmem>>, vector<8x32xf32>
      %c0_61 = arith.constant 0 : index
      %c0_62 = arith.constant 0 : index
      %155 = vector.load %arg12[%c0_61, %c0_62] : memref<8x32xf32, #tpu.memory_space<vmem>>, vector<8x32xf32>
      tpu.vector_store %arg12[%c0_61, %c0_62], %154 {strides = array<i32>} : memref<8x32xf32, #tpu.memory_space<vmem>>, vector<8x32xf32>,
    } else {
    }
    %c0 = arith.constant 0 : index
    %c0_1 = arith.constant 0 : index
    %c0_2 = arith.constant 0 : index
    %3 = vector.load %arg2[%c0, %c0_1, %c0_2] : memref<4x8x32xf32, #tpu.memory_space<vmem>>, vector<4x8x32xf32>
    %4 = vector.shape_cast %3 : vector<4x8x32xf32> to vector<32x32xf32>
    %c0_3 = arith.constant 0 : index
    %c0_4 = arith.constant 0 : index
    %5 = vector.load %arg3[%c0_3, %c0_4] : memref<32x128xf32, #tpu.memory_space<vmem>>, vector<32x128xf32>
    %cst = arith.constant dense<0.000000e+00> : vector<32x128xf32>
    %6 = tpu.matmul %4, %5, %cst {dimension_numbers = #tpu.dot_dimension_numbers<[1], [0], [0], [1], [0, 0, 1, 1], [], []>} : vector<32x32xf32>, vector<32x128xf32>, vector<32x128xf32> -> vector<32x128xf32>
    %c0_5 = arith.constant 0 : index
    %c0_6 = arith.constant 0 : index
    %7 = vector.load %arg5[%c0_5, %c0_6] : memref<1x128xf32, #tpu.memory_space<vmem>>, vector<1x128xf32>
    %8 = vector.broadcast %7 : vector<1x128xf32> to vector<32x128xf32>
    %9 = arith.addf %6, %8 : vector<32x128xf32>
    %10 = vector.shape_cast %9 : vector<32x128xf32> to vector<4x8x128xf32>
    %c0_7 = arith.constant 0 : index
    %c0_8 = arith.constant 0 : index
    %c0_9 = arith.constant 0 : index
    %11 = vector.load %arg13[%c0_7, %c0_8, %c0_9] : memref<4x8x128xf32, #tpu.memory_space<vmem>>, vector<4x8x128xf32>
    tpu.vector_store %arg13[%c0_7, %c0_8, %c0_9], %10 {strides = array<i32>} : memref<4x8x128xf32, #tpu.memory_space<vmem>>, vector<4x8x128xf32>,
    %c0_10 = arith.constant 0 : index
    %c0_11 = arith.constant 0 : index
    %12 = vector.load %arg4[%c0_10, %c0_11] : memref<32x128xf32, #tpu.memory_space<vmem>>, vector<32x128xf32>
    %c0_12 = arith.constant 0 : index
    %c0_13 = arith.constant 0 : index
    %13 = vector.load %arg11[%c0_12, %c0_13] : memref<8x32xf32, #tpu.memory_space<vmem>>, vector<8x32xf32>
    %c0_14 = arith.constant 0 : index
    %c0_15 = arith.constant 0 : index
    %14 = vector.load %arg12[%c0_14, %c0_15] : memref<8x32xf32, #tpu.memory_space<vmem>>, vector<8x32xf32>
    %c0_i32_16 = arith.constant 0 : i32
    %15 = arith.index_cast %c0_i32_16 : i32 to index
    %c0_17 = arith.constant 0 : index
    %c0_18 = arith.constant 0 : index
    %16 = vector.load %arg13[%15, %c0_17, %c0_18] : memref<4x8x128xf32, #tpu.memory_space<vmem>>, vector<1x8x128xf32>
    %17 = vector.shape_cast %16 : vector<1x8x128xf32> to vector<8x128xf32>
    %cst_19 = arith.constant dense<0.000000e+00> : vector<8x128xf32>
    %18 = tpu.matmul %13, %12, %cst_19 {dimension_numbers = #tpu.dot_dimension_numbers<[1], [0], [0], [1], [0, 0, 1, 1], [], []>} : vector<8x32xf32>, vector<32x128xf32>, vector<8x128xf32> -> vector<8x128xf32>
    %19 = arith.addf %17, %18 : vector<8x128xf32>
    %20 = vector.extract_strided_slice %19 {offsets = [0, 0], sizes = [8, 32], strides = [1, 1]} : vector<8x128xf32> to vector<8x32xf32>
    %21 = arith.negf %20 : vector<8x32xf32>
    %22 = math.exp %21 : vector<8x32xf32>
    %cst_20 = arith.constant 1.000000e+00 : f32
    %23 = vector.broadcast %cst_20 : f32 to vector<8x32xf32>
    %24 = arith.addf %23, %22 : vector<8x32xf32>
    %25 = arith.divf %23, %24 : vector<8x32xf32>
    %26 = vector.extract_strided_slice %19 {offsets = [0, 32], sizes = [8, 32], strides = [1, 1]} : vector<8x128xf32> to vector<8x32xf32>
    %27 = arith.negf %26 : vector<8x32xf32>
    %28 = math.exp %27 : vector<8x32xf32>
    %cst_21 = arith.constant 1.000000e+00 : f32
    %29 = vector.broadcast %cst_21 : f32 to vector<8x32xf32>
    %30 = arith.addf %29, %28 : vector<8x32xf32>
    %31 = arith.divf %29, %30 : vector<8x32xf32>
    %32 = vector.extract_strided_slice %19 {offsets = [0, 64], sizes = [8, 32], strides = [1, 1]} : vector<8x128xf32> to vector<8x32xf32>
    %33 = math.tanh %32 : vector<8x32xf32>
    %34 = vector.extract_strided_slice %19 {offsets = [0, 96], sizes = [8, 32], strides = [1, 1]} : vector<8x128xf32> to vector<8x32xf32>
    %35 = arith.negf %34 : vector<8x32xf32>
    %36 = math.exp %35 : vector<8x32xf32>
    %cst_22 = arith.constant 1.000000e+00 : f32
    %37 = vector.broadcast %cst_22 : f32 to vector<8x32xf32>
    %38 = arith.addf %37, %36 : vector<8x32xf32>
    %39 = arith.divf %37, %38 : vector<8x32xf32>
    %40 = arith.mulf %31, %14 : vector<8x32xf32>
    %41 = arith.mulf %25, %33 : vector<8x32xf32>
    %42 = arith.addf %40, %41 : vector<8x32xf32>
    %43 = math.tanh %42 : vector<8x32xf32>
    %44 = arith.mulf %39, %43 : vector<8x32xf32>
    %45 = vector.shape_cast %44 : vector<8x32xf32> to vector<1x8x32xf32>
    %46 = arith.index_cast %c0_i32_16 : i32 to index
    %c0_23 = arith.constant 0 : index
    %c0_24 = arith.constant 0 : index
    %47 = vector.load %arg8[%46, %c0_23, %c0_24] : memref<4x8x32xf32, #tpu.memory_space<vmem>>, vector<1x8x32xf32>
    tpu.vector_store %arg8[%46, %c0_23, %c0_24], %45 {strides = array<i32>} : memref<4x8x32xf32, #tpu.memory_space<vmem>>, vector<1x8x32xf32>,
    %c1_i32 = arith.constant 1 : i32
    %48 = arith.index_cast %c1_i32 : i32 to index
    %c0_25 = arith.constant 0 : index
    %c0_26 = arith.constant 0 : index
    %49 = vector.load %arg13[%48, %c0_25, %c0_26] : memref<4x8x128xf32, #tpu.memory_space<vmem>>, vector<1x8x128xf32>
    %50 = vector.shape_cast %49 : vector<1x8x128xf32> to vector<8x128xf32>
    %cst_27 = arith.constant dense<0.000000e+00> : vector<8x128xf32>
    %51 = tpu.matmul %44, %12, %cst_27 {dimension_numbers = #tpu.dot_dimension_numbers<[1], [0], [0], [1], [0, 0, 1, 1], [], []>} : vector<8x32xf32>, vector<32x128xf32>, vector<8x128xf32> -> vector<8x128xf32>
    %52 = arith.addf %50, %51 : vector<8x128xf32>
    %53 = vector.extract_strided_slice %52 {offsets = [0, 0], sizes = [8, 32], strides = [1, 1]} : vector<8x128xf32> to vector<8x32xf32>
    %54 = arith.negf %53 : vector<8x32xf32>
    %55 = math.exp %54 : vector<8x32xf32>
    %cst_28 = arith.constant 1.000000e+00 : f32
    %56 = vector.broadcast %cst_28 : f32 to vector<8x32xf32>
    %57 = arith.addf %56, %55 : vector<8x32xf32>
    %58 = arith.divf %56, %57 : vector<8x32xf32>
    %59 = vector.extract_strided_slice %52 {offsets = [0, 32], sizes = [8, 32], strides = [1, 1]} : vector<8x128xf32> to vector<8x32xf32>
    %60 = arith.negf %59 : vector<8x32xf32>
    %61 = math.exp %60 : vector<8x32xf32>
    %cst_29 = arith.constant 1.000000e+00 : f32
    %62 = vector.broadcast %cst_29 : f32 to vector<8x32xf32>
    %63 = arith.addf %62, %61 : vector<8x32xf32>
    %64 = arith.divf %62, %63 : vector<8x32xf32>
    %65 = vector.extract_strided_slice %52 {offsets = [0, 64], sizes = [8, 32], strides = [1, 1]} : vector<8x128xf32> to vector<8x32xf32>
    %66 = math.tanh %65 : vector<8x32xf32>
    %67 = vector.extract_strided_slice %52 {offsets = [0, 96], sizes = [8, 32], strides = [1, 1]} : vector<8x128xf32> to vector<8x32xf32>
    %68 = arith.negf %67 : vector<8x32xf32>
    %69 = math.exp %68 : vector<8x32xf32>
    %cst_30 = arith.constant 1.000000e+00 : f32
    %70 = vector.broadcast %cst_30 : f32 to vector<8x32xf32>
    %71 = arith.addf %70, %69 : vector<8x32xf32>
    %72 = arith.divf %70, %71 : vector<8x32xf32>
    %73 = arith.mulf %64, %42 : vector<8x32xf32>
    %74 = arith.mulf %58, %66 : vector<8x32xf32>
    %75 = arith.addf %73, %74 : vector<8x32xf32>
    %76 = math.tanh %75 : vector<8x32xf32>
    %77 = arith.mulf %72, %76 : vector<8x32xf32>
    %78 = vector.shape_cast %77 : vector<8x32xf32> to vector<1x8x32xf32>
    %79 = arith.index_cast %c1_i32 : i32 to index
    %c0_31 = arith.constant 0 : index
    %c0_32 = arith.constant 0 : index
    %80 = vector.load %arg8[%79, %c0_31, %c0_32] : memref<4x8x32xf32, #tpu.memory_space<vmem>>, vector<1x8x32xf32>
    tpu.vector_store %arg8[%79, %c0_31, %c0_32], %78 {strides = array<i32>} : memref<4x8x32xf32, #tpu.memory_space<vmem>>, vector<1x8x32xf32>,
    %c2_i32 = arith.constant 2 : i32
    %81 = arith.index_cast %c2_i32 : i32 to index
    %c0_33 = arith.constant 0 : index
    %c0_34 = arith.constant 0 : index
    %82 = vector.load %arg13[%81, %c0_33, %c0_34] : memref<4x8x128xf32, #tpu.memory_space<vmem>>, vector<1x8x128xf32>
    %83 = vector.shape_cast %82 : vector<1x8x128xf32> to vector<8x128xf32>
    %cst_35 = arith.constant dense<0.000000e+00> : vector<8x128xf32>
    %84 = tpu.matmul %77, %12, %cst_35 {dimension_numbers = #tpu.dot_dimension_numbers<[1], [0], [0], [1], [0, 0, 1, 1], [], []>} : vector<8x32xf32>, vector<32x128xf32>, vector<8x128xf32> -> vector<8x128xf32>
    %85 = arith.addf %83, %84 : vector<8x128xf32>
    %86 = vector.extract_strided_slice %85 {offsets = [0, 0], sizes = [8, 32], strides = [1, 1]} : vector<8x128xf32> to vector<8x32xf32>
    %87 = arith.negf %86 : vector<8x32xf32>
    %88 = math.exp %87 : vector<8x32xf32>
    %cst_36 = arith.constant 1.000000e+00 : f32
    %89 = vector.broadcast %cst_36 : f32 to vector<8x32xf32>
    %90 = arith.addf %89, %88 : vector<8x32xf32>
    %91 = arith.divf %89, %90 : vector<8x32xf32>
    %92 = vector.extract_strided_slice %85 {offsets = [0, 32], sizes = [8, 32], strides = [1, 1]} : vector<8x128xf32> to vector<8x32xf32>
    %93 = arith.negf %92 : vector<8x32xf32>
    %94 = math.exp %93 : vector<8x32xf32>
    %cst_37 = arith.constant 1.000000e+00 : f32
    %95 = vector.broadcast %cst_37 : f32 to vector<8x32xf32>
    %96 = arith.addf %95, %94 : vector<8x32xf32>
    %97 = arith.divf %95, %96 : vector<8x32xf32>
    %98 = vector.extract_strided_slice %85 {offsets = [0, 64], sizes = [8, 32], strides = [1, 1]} : vector<8x128xf32> to vector<8x32xf32>
    %99 = math.tanh %98 : vector<8x32xf32>
    %100 = vector.extract_strided_slice %85 {offsets = [0, 96], sizes = [8, 32], strides = [1, 1]} : vector<8x128xf32> to vector<8x32xf32>
    %101 = arith.negf %100 : vector<8x32xf32>
    %102 = math.exp %101 : vector<8x32xf32>
    %cst_38 = arith.constant 1.000000e+00 : f32
    %103 = vector.broadcast %cst_38 : f32 to vector<8x32xf32>
    %104 = arith.addf %103, %102 : vector<8x32xf32>
    %105 = arith.divf %103, %104 : vector<8x32xf32>
    %106 = arith.mulf %97, %75 : vector<8x32xf32>
    %107 = arith.mulf %91, %99 : vector<8x32xf32>
    %108 = arith.addf %106, %107 : vector<8x32xf32>
    %109 = math.tanh %108 : vector<8x32xf32>
    %110 = arith.mulf %105, %109 : vector<8x32xf32>
    %111 = vector.shape_cast %110 : vector<8x32xf32> to vector<1x8x32xf32>
    %112 = arith.index_cast %c2_i32 : i32 to index
    %c0_39 = arith.constant 0 : index
    %c0_40 = arith.constant 0 : index
    %113 = vector.load %arg8[%112, %c0_39, %c0_40] : memref<4x8x32xf32, #tpu.memory_space<vmem>>, vector<1x8x32xf32>
    tpu.vector_store %arg8[%112, %c0_39, %c0_40], %111 {strides = array<i32>} : memref<4x8x32xf32, #tpu.memory_space<vmem>>, vector<1x8x32xf32>,
    %c3_i32 = arith.constant 3 : i32
    %114 = arith.index_cast %c3_i32 : i32 to index
    %c0_41 = arith.constant 0 : index
    %c0_42 = arith.constant 0 : index
    %115 = vector.load %arg13[%114, %c0_41, %c0_42] : memref<4x8x128xf32, #tpu.memory_space<vmem>>, vector<1x8x128xf32>
    %116 = vector.shape_cast %115 : vector<1x8x128xf32> to vector<8x128xf32>
    %cst_43 = arith.constant dense<0.000000e+00> : vector<8x128xf32>
    %117 = tpu.matmul %110, %12, %cst_43 {dimension_numbers = #tpu.dot_dimension_numbers<[1], [0], [0], [1], [0, 0, 1, 1], [], []>} : vector<8x32xf32>, vector<32x128xf32>, vector<8x128xf32> -> vector<8x128xf32>
    %118 = arith.addf %116, %117 : vector<8x128xf32>
    %119 = vector.extract_strided_slice %118 {offsets = [0, 0], sizes = [8, 32], strides = [1, 1]} : vector<8x128xf32> to vector<8x32xf32>
    %120 = arith.negf %119 : vector<8x32xf32>
    %121 = math.exp %120 : vector<8x32xf32>
    %cst_44 = arith.constant 1.000000e+00 : f32
    %122 = vector.broadcast %cst_44 : f32 to vector<8x32xf32>
    %123 = arith.addf %122, %121 : vector<8x32xf32>
    %124 = arith.divf %122, %123 : vector<8x32xf32>
    %125 = vector.extract_strided_slice %118 {offsets = [0, 32], sizes = [8, 32], strides = [1, 1]} : vector<8x128xf32> to vector<8x32xf32>
    %126 = arith.negf %125 : vector<8x32xf32>
    %127 = math.exp %126 : vector<8x32xf32>
    %cst_45 = arith.constant 1.000000e+00 : f32
    %128 = vector.broadcast %cst_45 : f32 to vector<8x32xf32>
    %129 = arith.addf %128, %127 : vector<8x32xf32>
    %130 = arith.divf %128, %129 : vector<8x32xf32>
    %131 = vector.extract_strided_slice %118 {offsets = [0, 64], sizes = [8, 32], strides = [1, 1]} : vector<8x128xf32> to vector<8x32xf32>
    %132 = math.tanh %131 : vector<8x32xf32>
    %133 = vector.extract_strided_slice %118 {offsets = [0, 96], sizes = [8, 32], strides = [1, 1]} : vector<8x128xf32> to vector<8x32xf32>
    %134 = arith.negf %133 : vector<8x32xf32>
    %135 = math.exp %134 : vector<8x32xf32>
    %cst_46 = arith.constant 1.000000e+00 : f32
    %136 = vector.broadcast %cst_46 : f32 to vector<8x32xf32>
    %137 = arith.addf %136, %135 : vector<8x32xf32>
    %138 = arith.divf %136, %137 : vector<8x32xf32>
    %139 = arith.mulf %130, %108 : vector<8x32xf32>
    %140 = arith.mulf %124, %132 : vector<8x32xf32>
    %141 = arith.addf %139, %140 : vector<8x32xf32>
    %142 = math.tanh %141 : vector<8x32xf32>
    %143 = arith.mulf %138, %142 : vector<8x32xf32>
    %144 = vector.shape_cast %143 : vector<8x32xf32> to vector<1x8x32xf32>
    %145 = arith.index_cast %c3_i32 : i32 to index
    %c0_47 = arith.constant 0 : index
    %c0_48 = arith.constant 0 : index
    %146 = vector.load %arg8[%145, %c0_47, %c0_48] : memref<4x8x32xf32, #tpu.memory_space<vmem>>, vector<1x8x32xf32>
    tpu.vector_store %arg8[%145, %c0_47, %c0_48], %144 {strides = array<i32>} : memref<4x8x32xf32, #tpu.memory_space<vmem>>, vector<1x8x32xf32>,
    %c4_i32 = arith.constant 4 : i32
    %c0_49 = arith.constant 0 : index
    %c0_50 = arith.constant 0 : index
    %147 = vector.load %arg11[%c0_49, %c0_50] : memref<8x32xf32, #tpu.memory_space<vmem>>, vector<8x32xf32>
    tpu.vector_store %arg11[%c0_49, %c0_50], %143 {strides = array<i32>} : memref<8x32xf32, #tpu.memory_space<vmem>>, vector<8x32xf32>,
    %c0_51 = arith.constant 0 : index
    %c0_52 = arith.constant 0 : index
    %148 = vector.load %arg12[%c0_51, %c0_52] : memref<8x32xf32, #tpu.memory_space<vmem>>, vector<8x32xf32>
    tpu.vector_store %arg12[%c0_51, %c0_52], %141 {strides = array<i32>} : memref<8x32xf32, #tpu.memory_space<vmem>>, vector<8x32xf32>,
    %c1_i32_53 = arith.constant 1 : i32
    %149 = arith.cmpi eq, %arg1, %c1_i32_53 : i32
    %150 = arith.extui %149 : i1 to i32
    %c0_i32_54 = arith.constant 0 : i32
    %151 = arith.cmpi ne, %150, %c0_i32_54 : i32
    scf.if %151 {
      %c0_55 = arith.constant 0 : index
      %c0_56 = arith.constant 0 : index
      %152 = vector.load %arg9[%c0_55, %c0_56] : memref<8x32xf32, #tpu.memory_space<vmem>>, vector<8x32xf32>
      tpu.vector_store %arg9[%c0_55, %c0_56], %143 {strides = array<i32>} : memref<8x32xf32, #tpu.memory_space<vmem>>, vector<8x32xf32>,
      %c0_57 = arith.constant 0 : index
      %c0_58 = arith.constant 0 : index
      %153 = vector.load %arg10[%c0_57, %c0_58] : memref<8x32xf32, #tpu.memory_space<vmem>>, vector<8x32xf32>
      tpu.vector_store %arg10[%c0_57, %c0_58], %141 {strides = array<i32>} : memref<8x32xf32, #tpu.memory_space<vmem>>, vector<8x32xf32>,
    } else {
    }
    return
  }
  func.func @transform_0(%arg0: i32, %arg1: i32) -> (i32, i32, i32) {
    %c0_i32 = arith.constant 0 : i32
    %c0_i32_0 = arith.constant 0 : i32
    return %arg1, %arg0, %c0_i32 : i32, i32, i32
  }
  func.func @transform_1(%arg0: i32, %arg1: i32) -> (i32, i32) {
    %c0_i32 = arith.constant 0 : i32
    %c0_i32_0 = arith.constant 0 : i32
    %c0_i32_1 = arith.constant 0 : i32
    return %c0_i32, %c0_i32_0 : i32, i32
  }
  func.func @transform_2(%arg0: i32, %arg1: i32) -> (i32, i32) {
    %c0_i32 = arith.constant 0 : i32
    %c0_i32_0 = arith.constant 0 : i32
    %c0_i32_1 = arith.constant 0 : i32
    return %c0_i32, %c0_i32_0 : i32, i32
  }
  func.func @transform_3(%arg0: i32, %arg1: i32) -> (i32, i32) {
    %c0_i32 = arith.constant 0 : i32
    %c0_i32_0 = arith.constant 0 : i32
    %c0_i32_1 = arith.constant 0 : i32
    return %c0_i32, %c0_i32_0 : i32, i32
  }
  func.func @transform_4(%arg0: i32, %arg1: i32) -> (i32, i32) {
    %c0_i32 = arith.constant 0 : i32
    %c0_i32_0 = arith.constant 0 : i32
    return %arg0, %c0_i32 : i32, i32
  }
  func.func @transform_5(%arg0: i32, %arg1: i32) -> (i32, i32) {
    %c0_i32 = arith.constant 0 : i32
    %c0_i32_0 = arith.constant 0 : i32
    return %arg0, %c0_i32 : i32, i32
  }
  func.func @transform_6(%arg0: i32, %arg1: i32) -> (i32, i32, i32) {
    %c0_i32 = arith.constant 0 : i32
    %c0_i32_0 = arith.constant 0 : i32
    return %arg1, %arg0, %c0_i32 : i32, i32, i32
  }
  func.func @transform_7(%arg0: i32, %arg1: i32) -> (i32, i32) {
    %c0_i32 = arith.constant 0 : i32
    %c0_i32_0 = arith.constant 0 : i32
    return %arg0, %c0_i32 : i32, i32
  }
  func.func @transform_8(%arg0: i32, %arg1: i32) -> (i32, i32) {
    %c0_i32 = arith.constant 0 : i32
    %c0_i32_0 = arith.constant 0 : i32
    return %arg0, %c0_i32 : i32, i32
  }
}

module attributes {stable_mosaic.version = 11 : i64} {
  func.func @lstm_last_kernel(%arg0: i32, %arg1: i32, %arg2: memref<4x8x32xf32, #tpu.memory_space<vmem>>, %arg3: memref<32x128xf32, #tpu.memory_space<vmem>>, %arg4: memref<32x128xf32, #tpu.memory_space<vmem>>, %arg5: memref<1x128xf32, #tpu.memory_space<vmem>>, %arg6: memref<8x32xf32, #tpu.memory_space<vmem>>, %arg7: memref<8x32xf32, #tpu.memory_space<vmem>>, %arg8: memref<32x2xf32, #tpu.memory_space<vmem>>, %arg9: memref<1x2xf32, #tpu.memory_space<vmem>>, %arg10: memref<8x2xf32, #tpu.memory_space<vmem>>, %arg11: memref<8x32xf32, #tpu.memory_space<vmem>>, %arg12: memref<8x32xf32, #tpu.memory_space<vmem>>, %arg13: memref<8x32xf32, #tpu.memory_space<vmem>>, %arg14: memref<8x32xf32, #tpu.memory_space<vmem>>, %arg15: memref<4x8x128xf32, #tpu.memory_space<vmem>>) attributes {dimension_semantics = [#tpu.dimension_semantics<parallel>, #tpu.dimension_semantics<arbitrary>], iteration_bounds = array<i64: 1, 2>, scalar_prefetch = 0 : i64, scratch_operands = 3 : i64, tpu.core_type = #tpu.core_type<tc>, window_params = [{transform_indices = @transform_0, window_bounds = array<i64: 4, 8, 32>}, {pipeline_mode = #tpu.pipeline_mode<synchronous>, transform_indices = @transform_1, window_bounds = array<i64: 32, 128>}, {pipeline_mode = #tpu.pipeline_mode<synchronous>, transform_indices = @transform_2, window_bounds = array<i64: 32, 128>}, {pipeline_mode = #tpu.pipeline_mode<synchronous>, transform_indices = @transform_3, window_bounds = array<i64: 1, 128>}, {transform_indices = @transform_4, window_bounds = array<i64: 8, 32>}, {transform_indices = @transform_5, window_bounds = array<i64: 8, 32>}, {pipeline_mode = #tpu.pipeline_mode<synchronous>, transform_indices = @transform_6, window_bounds = array<i64: 32, 2>}, {pipeline_mode = #tpu.pipeline_mode<synchronous>, transform_indices = @transform_7, window_bounds = array<i64: 1, 2>}, {transform_indices = @transform_8, window_bounds = array<i64: 8, 2>}, {transform_indices = @transform_9, window_bounds = array<i64: 8, 32>}, {transform_indices = @transform_10, window_bounds = array<i64: 8, 32>}]} {
    %c0_i32 = arith.constant 0 : i32
    %0 = arith.cmpi eq, %arg1, %c0_i32 : i32
    %1 = arith.extui %0 : i1 to i32
    %c0_i32_0 = arith.constant 0 : i32
    %2 = arith.cmpi ne, %1, %c0_i32_0 : i32
    scf.if %2 {
      %c0_47 = arith.constant 0 : index
      %c0_48 = arith.constant 0 : index
      %140 = vector.load %arg6[%c0_47, %c0_48] : memref<8x32xf32, #tpu.memory_space<vmem>>, vector<8x32xf32>
      %c0_49 = arith.constant 0 : index
      %c0_50 = arith.constant 0 : index
      %141 = vector.load %arg13[%c0_49, %c0_50] : memref<8x32xf32, #tpu.memory_space<vmem>>, vector<8x32xf32>
      tpu.vector_store %arg13[%c0_49, %c0_50], %140 {strides = array<i32>} : memref<8x32xf32, #tpu.memory_space<vmem>>, vector<8x32xf32>,
      %c0_51 = arith.constant 0 : index
      %c0_52 = arith.constant 0 : index
      %142 = vector.load %arg7[%c0_51, %c0_52] : memref<8x32xf32, #tpu.memory_space<vmem>>, vector<8x32xf32>
      %c0_53 = arith.constant 0 : index
      %c0_54 = arith.constant 0 : index
      %143 = vector.load %arg14[%c0_53, %c0_54] : memref<8x32xf32, #tpu.memory_space<vmem>>, vector<8x32xf32>
      tpu.vector_store %arg14[%c0_53, %c0_54], %142 {strides = array<i32>} : memref<8x32xf32, #tpu.memory_space<vmem>>, vector<8x32xf32>,
    } else {
    }
    %c0 = arith.constant 0 : index
    %c0_1 = arith.constant 0 : index
    %c0_2 = arith.constant 0 : index
    %3 = vector.load %arg2[%c0, %c0_1, %c0_2] : memref<4x8x32xf32, #tpu.memory_space<vmem>>, vector<4x8x32xf32>
    %4 = vector.shape_cast %3 : vector<4x8x32xf32> to vector<32x32xf32>
    %c0_3 = arith.constant 0 : index
    %c0_4 = arith.constant 0 : index
    %5 = vector.load %arg3[%c0_3, %c0_4] : memref<32x128xf32, #tpu.memory_space<vmem>>, vector<32x128xf32>
    %cst = arith.constant dense<0.000000e+00> : vector<32x128xf32>
    %6 = tpu.matmul %4, %5, %cst {dimension_numbers = #tpu.dot_dimension_numbers<[1], [0], [0], [1], [0, 0, 1, 1], [], []>} : vector<32x32xf32>, vector<32x128xf32>, vector<32x128xf32> -> vector<32x128xf32>
    %c0_5 = arith.constant 0 : index
    %c0_6 = arith.constant 0 : index
    %7 = vector.load %arg5[%c0_5, %c0_6] : memref<1x128xf32, #tpu.memory_space<vmem>>, vector<1x128xf32>
    %8 = vector.broadcast %7 : vector<1x128xf32> to vector<32x128xf32>
    %9 = arith.addf %6, %8 : vector<32x128xf32>
    %10 = vector.shape_cast %9 : vector<32x128xf32> to vector<4x8x128xf32>
    %c0_7 = arith.constant 0 : index
    %c0_8 = arith.constant 0 : index
    %c0_9 = arith.constant 0 : index
    %11 = vector.load %arg15[%c0_7, %c0_8, %c0_9] : memref<4x8x128xf32, #tpu.memory_space<vmem>>, vector<4x8x128xf32>
    tpu.vector_store %arg15[%c0_7, %c0_8, %c0_9], %10 {strides = array<i32>} : memref<4x8x128xf32, #tpu.memory_space<vmem>>, vector<4x8x128xf32>,
    %c0_10 = arith.constant 0 : index
    %c0_11 = arith.constant 0 : index
    %12 = vector.load %arg4[%c0_10, %c0_11] : memref<32x128xf32, #tpu.memory_space<vmem>>, vector<32x128xf32>
    %c0_12 = arith.constant 0 : index
    %c0_13 = arith.constant 0 : index
    %13 = vector.load %arg13[%c0_12, %c0_13] : memref<8x32xf32, #tpu.memory_space<vmem>>, vector<8x32xf32>
    %c0_14 = arith.constant 0 : index
    %c0_15 = arith.constant 0 : index
    %14 = vector.load %arg14[%c0_14, %c0_15] : memref<8x32xf32, #tpu.memory_space<vmem>>, vector<8x32xf32>
    %c0_i32_16 = arith.constant 0 : i32
    %15 = arith.index_cast %c0_i32_16 : i32 to index
    %c0_17 = arith.constant 0 : index
    %c0_18 = arith.constant 0 : index
    %16 = vector.load %arg15[%15, %c0_17, %c0_18] : memref<4x8x128xf32, #tpu.memory_space<vmem>>, vector<1x8x128xf32>
    %17 = vector.shape_cast %16 : vector<1x8x128xf32> to vector<8x128xf32>
    %cst_19 = arith.constant dense<0.000000e+00> : vector<8x128xf32>
    %18 = tpu.matmul %13, %12, %cst_19 {dimension_numbers = #tpu.dot_dimension_numbers<[1], [0], [0], [1], [0, 0, 1, 1], [], []>} : vector<8x32xf32>, vector<32x128xf32>, vector<8x128xf32> -> vector<8x128xf32>
    %19 = arith.addf %17, %18 : vector<8x128xf32>
    %20 = vector.extract_strided_slice %19 {offsets = [0, 0], sizes = [8, 32], strides = [1, 1]} : vector<8x128xf32> to vector<8x32xf32>
    %21 = arith.negf %20 : vector<8x32xf32>
    %22 = math.exp %21 : vector<8x32xf32>
    %cst_20 = arith.constant 1.000000e+00 : f32
    %23 = vector.broadcast %cst_20 : f32 to vector<8x32xf32>
    %24 = arith.addf %23, %22 : vector<8x32xf32>
    %25 = arith.divf %23, %24 : vector<8x32xf32>
    %26 = vector.extract_strided_slice %19 {offsets = [0, 32], sizes = [8, 32], strides = [1, 1]} : vector<8x128xf32> to vector<8x32xf32>
    %27 = arith.negf %26 : vector<8x32xf32>
    %28 = math.exp %27 : vector<8x32xf32>
    %cst_21 = arith.constant 1.000000e+00 : f32
    %29 = vector.broadcast %cst_21 : f32 to vector<8x32xf32>
    %30 = arith.addf %29, %28 : vector<8x32xf32>
    %31 = arith.divf %29, %30 : vector<8x32xf32>
    %32 = vector.extract_strided_slice %19 {offsets = [0, 64], sizes = [8, 32], strides = [1, 1]} : vector<8x128xf32> to vector<8x32xf32>
    %33 = math.tanh %32 : vector<8x32xf32>
    %34 = vector.extract_strided_slice %19 {offsets = [0, 96], sizes = [8, 32], strides = [1, 1]} : vector<8x128xf32> to vector<8x32xf32>
    %35 = arith.negf %34 : vector<8x32xf32>
    %36 = math.exp %35 : vector<8x32xf32>
    %cst_22 = arith.constant 1.000000e+00 : f32
    %37 = vector.broadcast %cst_22 : f32 to vector<8x32xf32>
    %38 = arith.addf %37, %36 : vector<8x32xf32>
    %39 = arith.divf %37, %38 : vector<8x32xf32>
    %40 = arith.mulf %31, %14 : vector<8x32xf32>
    %41 = arith.mulf %25, %33 : vector<8x32xf32>
    %42 = arith.addf %40, %41 : vector<8x32xf32>
    %43 = math.tanh %42 : vector<8x32xf32>
    %44 = arith.mulf %39, %43 : vector<8x32xf32>
    %c1_i32 = arith.constant 1 : i32
    %45 = arith.index_cast %c1_i32 : i32 to index
    %c0_23 = arith.constant 0 : index
    %c0_24 = arith.constant 0 : index
    %46 = vector.load %arg15[%45, %c0_23, %c0_24] : memref<4x8x128xf32, #tpu.memory_space<vmem>>, vector<1x8x128xf32>
    %47 = vector.shape_cast %46 : vector<1x8x128xf32> to vector<8x128xf32>
    %cst_25 = arith.constant dense<0.000000e+00> : vector<8x128xf32>
    %48 = tpu.matmul %44, %12, %cst_25 {dimension_numbers = #tpu.dot_dimension_numbers<[1], [0], [0], [1], [0, 0, 1, 1], [], []>} : vector<8x32xf32>, vector<32x128xf32>, vector<8x128xf32> -> vector<8x128xf32>
    %49 = arith.addf %47, %48 : vector<8x128xf32>
    %50 = vector.extract_strided_slice %49 {offsets = [0, 0], sizes = [8, 32], strides = [1, 1]} : vector<8x128xf32> to vector<8x32xf32>
    %51 = arith.negf %50 : vector<8x32xf32>
    %52 = math.exp %51 : vector<8x32xf32>
    %cst_26 = arith.constant 1.000000e+00 : f32
    %53 = vector.broadcast %cst_26 : f32 to vector<8x32xf32>
    %54 = arith.addf %53, %52 : vector<8x32xf32>
    %55 = arith.divf %53, %54 : vector<8x32xf32>
    %56 = vector.extract_strided_slice %49 {offsets = [0, 32], sizes = [8, 32], strides = [1, 1]} : vector<8x128xf32> to vector<8x32xf32>
    %57 = arith.negf %56 : vector<8x32xf32>
    %58 = math.exp %57 : vector<8x32xf32>
    %cst_27 = arith.constant 1.000000e+00 : f32
    %59 = vector.broadcast %cst_27 : f32 to vector<8x32xf32>
    %60 = arith.addf %59, %58 : vector<8x32xf32>
    %61 = arith.divf %59, %60 : vector<8x32xf32>
    %62 = vector.extract_strided_slice %49 {offsets = [0, 64], sizes = [8, 32], strides = [1, 1]} : vector<8x128xf32> to vector<8x32xf32>
    %63 = math.tanh %62 : vector<8x32xf32>
    %64 = vector.extract_strided_slice %49 {offsets = [0, 96], sizes = [8, 32], strides = [1, 1]} : vector<8x128xf32> to vector<8x32xf32>
    %65 = arith.negf %64 : vector<8x32xf32>
    %66 = math.exp %65 : vector<8x32xf32>
    %cst_28 = arith.constant 1.000000e+00 : f32
    %67 = vector.broadcast %cst_28 : f32 to vector<8x32xf32>
    %68 = arith.addf %67, %66 : vector<8x32xf32>
    %69 = arith.divf %67, %68 : vector<8x32xf32>
    %70 = arith.mulf %61, %42 : vector<8x32xf32>
    %71 = arith.mulf %55, %63 : vector<8x32xf32>
    %72 = arith.addf %70, %71 : vector<8x32xf32>
    %73 = math.tanh %72 : vector<8x32xf32>
    %74 = arith.mulf %69, %73 : vector<8x32xf32>
    %c2_i32 = arith.constant 2 : i32
    %75 = arith.index_cast %c2_i32 : i32 to index
    %c0_29 = arith.constant 0 : index
    %c0_30 = arith.constant 0 : index
    %76 = vector.load %arg15[%75, %c0_29, %c0_30] : memref<4x8x128xf32, #tpu.memory_space<vmem>>, vector<1x8x128xf32>
    %77 = vector.shape_cast %76 : vector<1x8x128xf32> to vector<8x128xf32>
    %cst_31 = arith.constant dense<0.000000e+00> : vector<8x128xf32>
    %78 = tpu.matmul %74, %12, %cst_31 {dimension_numbers = #tpu.dot_dimension_numbers<[1], [0], [0], [1], [0, 0, 1, 1], [], []>} : vector<8x32xf32>, vector<32x128xf32>, vector<8x128xf32> -> vector<8x128xf32>
    %79 = arith.addf %77, %78 : vector<8x128xf32>
    %80 = vector.extract_strided_slice %79 {offsets = [0, 0], sizes = [8, 32], strides = [1, 1]} : vector<8x128xf32> to vector<8x32xf32>
    %81 = arith.negf %80 : vector<8x32xf32>
    %82 = math.exp %81 : vector<8x32xf32>
    %cst_32 = arith.constant 1.000000e+00 : f32
    %83 = vector.broadcast %cst_32 : f32 to vector<8x32xf32>
    %84 = arith.addf %83, %82 : vector<8x32xf32>
    %85 = arith.divf %83, %84 : vector<8x32xf32>
    %86 = vector.extract_strided_slice %79 {offsets = [0, 32], sizes = [8, 32], strides = [1, 1]} : vector<8x128xf32> to vector<8x32xf32>
    %87 = arith.negf %86 : vector<8x32xf32>
    %88 = math.exp %87 : vector<8x32xf32>
    %cst_33 = arith.constant 1.000000e+00 : f32
    %89 = vector.broadcast %cst_33 : f32 to vector<8x32xf32>
    %90 = arith.addf %89, %88 : vector<8x32xf32>
    %91 = arith.divf %89, %90 : vector<8x32xf32>
    %92 = vector.extract_strided_slice %79 {offsets = [0, 64], sizes = [8, 32], strides = [1, 1]} : vector<8x128xf32> to vector<8x32xf32>
    %93 = math.tanh %92 : vector<8x32xf32>
    %94 = vector.extract_strided_slice %79 {offsets = [0, 96], sizes = [8, 32], strides = [1, 1]} : vector<8x128xf32> to vector<8x32xf32>
    %95 = arith.negf %94 : vector<8x32xf32>
    %96 = math.exp %95 : vector<8x32xf32>
    %cst_34 = arith.constant 1.000000e+00 : f32
    %97 = vector.broadcast %cst_34 : f32 to vector<8x32xf32>
    %98 = arith.addf %97, %96 : vector<8x32xf32>
    %99 = arith.divf %97, %98 : vector<8x32xf32>
    %100 = arith.mulf %91, %72 : vector<8x32xf32>
    %101 = arith.mulf %85, %93 : vector<8x32xf32>
    %102 = arith.addf %100, %101 : vector<8x32xf32>
    %103 = math.tanh %102 : vector<8x32xf32>
    %104 = arith.mulf %99, %103 : vector<8x32xf32>
    %c3_i32 = arith.constant 3 : i32
    %105 = arith.index_cast %c3_i32 : i32 to index
    %c0_35 = arith.constant 0 : index
    %c0_36 = arith.constant 0 : index
    %106 = vector.load %arg15[%105, %c0_35, %c0_36] : memref<4x8x128xf32, #tpu.memory_space<vmem>>, vector<1x8x128xf32>
    %107 = vector.shape_cast %106 : vector<1x8x128xf32> to vector<8x128xf32>
    %cst_37 = arith.constant dense<0.000000e+00> : vector<8x128xf32>
    %108 = tpu.matmul %104, %12, %cst_37 {dimension_numbers = #tpu.dot_dimension_numbers<[1], [0], [0], [1], [0, 0, 1, 1], [], []>} : vector<8x32xf32>, vector<32x128xf32>, vector<8x128xf32> -> vector<8x128xf32>
    %109 = arith.addf %107, %108 : vector<8x128xf32>
    %110 = vector.extract_strided_slice %109 {offsets = [0, 0], sizes = [8, 32], strides = [1, 1]} : vector<8x128xf32> to vector<8x32xf32>
    %111 = arith.negf %110 : vector<8x32xf32>
    %112 = math.exp %111 : vector<8x32xf32>
    %cst_38 = arith.constant 1.000000e+00 : f32
    %113 = vector.broadcast %cst_38 : f32 to vector<8x32xf32>
    %114 = arith.addf %113, %112 : vector<8x32xf32>
    %115 = arith.divf %113, %114 : vector<8x32xf32>
    %116 = vector.extract_strided_slice %109 {offsets = [0, 32], sizes = [8, 32], strides = [1, 1]} : vector<8x128xf32> to vector<8x32xf32>
    %117 = arith.negf %116 : vector<8x32xf32>
    %118 = math.exp %117 : vector<8x32xf32>
    %cst_39 = arith.constant 1.000000e+00 : f32
    %119 = vector.broadcast %cst_39 : f32 to vector<8x32xf32>
    %120 = arith.addf %119, %118 : vector<8x32xf32>
    %121 = arith.divf %119, %120 : vector<8x32xf32>
    %122 = vector.extract_strided_slice %109 {offsets = [0, 64], sizes = [8, 32], strides = [1, 1]} : vector<8x128xf32> to vector<8x32xf32>
    %123 = math.tanh %122 : vector<8x32xf32>
    %124 = vector.extract_strided_slice %109 {offsets = [0, 96], sizes = [8, 32], strides = [1, 1]} : vector<8x128xf32> to vector<8x32xf32>
    %125 = arith.negf %124 : vector<8x32xf32>
    %126 = math.exp %125 : vector<8x32xf32>
    %cst_40 = arith.constant 1.000000e+00 : f32
    %127 = vector.broadcast %cst_40 : f32 to vector<8x32xf32>
    %128 = arith.addf %127, %126 : vector<8x32xf32>
    %129 = arith.divf %127, %128 : vector<8x32xf32>
    %130 = arith.mulf %121, %102 : vector<8x32xf32>
    %131 = arith.mulf %115, %123 : vector<8x32xf32>
    %132 = arith.addf %130, %131 : vector<8x32xf32>
    %133 = math.tanh %132 : vector<8x32xf32>
    %134 = arith.mulf %129, %133 : vector<8x32xf32>
    %c4_i32 = arith.constant 4 : i32
    %c0_41 = arith.constant 0 : index
    %c0_42 = arith.constant 0 : index
    %135 = vector.load %arg13[%c0_41, %c0_42] : memref<8x32xf32, #tpu.memory_space<vmem>>, vector<8x32xf32>
    tpu.vector_store %arg13[%c0_41, %c0_42], %134 {strides = array<i32>} : memref<8x32xf32, #tpu.memory_space<vmem>>, vector<8x32xf32>,
    %c0_43 = arith.constant 0 : index
    %c0_44 = arith.constant 0 : index
    %136 = vector.load %arg14[%c0_43, %c0_44] : memref<8x32xf32, #tpu.memory_space<vmem>>, vector<8x32xf32>
    tpu.vector_store %arg14[%c0_43, %c0_44], %132 {strides = array<i32>} : memref<8x32xf32, #tpu.memory_space<vmem>>, vector<8x32xf32>,
    %c1_i32_45 = arith.constant 1 : i32
    %137 = arith.cmpi eq, %arg1, %c1_i32_45 : i32
    %138 = arith.extui %137 : i1 to i32
    %c0_i32_46 = arith.constant 0 : i32
    %139 = arith.cmpi ne, %138, %c0_i32_46 : i32
    scf.if %139 {
      %c0_47 = arith.constant 0 : index
      %c0_48 = arith.constant 0 : index
      %140 = vector.load %arg11[%c0_47, %c0_48] : memref<8x32xf32, #tpu.memory_space<vmem>>, vector<8x32xf32>
      tpu.vector_store %arg11[%c0_47, %c0_48], %134 {strides = array<i32>} : memref<8x32xf32, #tpu.memory_space<vmem>>, vector<8x32xf32>,
      %c0_49 = arith.constant 0 : index
      %c0_50 = arith.constant 0 : index
      %141 = vector.load %arg12[%c0_49, %c0_50] : memref<8x32xf32, #tpu.memory_space<vmem>>, vector<8x32xf32>
      tpu.vector_store %arg12[%c0_49, %c0_50], %132 {strides = array<i32>} : memref<8x32xf32, #tpu.memory_space<vmem>>, vector<8x32xf32>,
      %c0_51 = arith.constant 0 : index
      %c0_52 = arith.constant 0 : index
      %142 = vector.load %arg8[%c0_51, %c0_52] : memref<32x2xf32, #tpu.memory_space<vmem>>, vector<32x2xf32>
      %cst_53 = arith.constant dense<0.000000e+00> : vector<8x2xf32>
      %143 = tpu.matmul %134, %142, %cst_53 {dimension_numbers = #tpu.dot_dimension_numbers<[1], [0], [0], [1], [0, 0, 1, 1], [], []>} : vector<8x32xf32>, vector<32x2xf32>, vector<8x2xf32> -> vector<8x2xf32>
      %c0_54 = arith.constant 0 : index
      %c0_55 = arith.constant 0 : index
      %144 = vector.load %arg9[%c0_54, %c0_55] : memref<1x2xf32, #tpu.memory_space<vmem>>, vector<1x2xf32>
      %145 = vector.broadcast %144 : vector<1x2xf32> to vector<8x2xf32>
      %146 = arith.addf %143, %145 : vector<8x2xf32>
      %cst_56 = arith.constant dense<0xFF800000> : vector<8xf32>
      %147 = vector.multi_reduction <maximumf>, %146, %cst_56 [1] : vector<8x2xf32> to vector<8xf32>
      %148 = vector.shape_cast %147 : vector<8xf32> to vector<8x1xf32>
      %149 = vector.broadcast %148 : vector<8x1xf32> to vector<8x2xf32>
      %150 = arith.subf %146, %149 : vector<8x2xf32>
      %151 = math.exp %150 : vector<8x2xf32>
      %cst_57 = arith.constant dense<0.000000e+00> : vector<8xf32>
      %152 = vector.multi_reduction <add>, %151, %cst_57 [1] : vector<8x2xf32> to vector<8xf32>
      %153 = vector.shape_cast %152 : vector<8xf32> to vector<8x1xf32>
      %154 = vector.broadcast %153 : vector<8x1xf32> to vector<8x2xf32>
      %155 = arith.divf %151, %154 : vector<8x2xf32>
      %c0_58 = arith.constant 0 : index
      %c0_59 = arith.constant 0 : index
      %156 = vector.load %arg10[%c0_58, %c0_59] : memref<8x2xf32, #tpu.memory_space<vmem>>, vector<8x2xf32>
      tpu.vector_store %arg10[%c0_58, %c0_59], %155 {strides = array<i32>} : memref<8x2xf32, #tpu.memory_space<vmem>>, vector<8x2xf32>,
    } else {
    }
    return
  }
  func.func @transform_0(%arg0: i32, %arg1: i32) -> (i32, i32, i32) {
    %c0_i32 = arith.constant 0 : i32
    %c0_i32_0 = arith.constant 0 : i32
    return %arg1, %arg0, %c0_i32 : i32, i32, i32
  }
  func.func @transform_1(%arg0: i32, %arg1: i32) -> (i32, i32) {
    %c0_i32 = arith.constant 0 : i32
    %c0_i32_0 = arith.constant 0 : i32
    %c0_i32_1 = arith.constant 0 : i32
    return %c0_i32, %c0_i32_0 : i32, i32
  }
  func.func @transform_2(%arg0: i32, %arg1: i32) -> (i32, i32) {
    %c0_i32 = arith.constant 0 : i32
    %c0_i32_0 = arith.constant 0 : i32
    %c0_i32_1 = arith.constant 0 : i32
    return %c0_i32, %c0_i32_0 : i32, i32
  }
  func.func @transform_3(%arg0: i32, %arg1: i32) -> (i32, i32) {
    %c0_i32 = arith.constant 0 : i32
    %c0_i32_0 = arith.constant 0 : i32
    %c0_i32_1 = arith.constant 0 : i32
    return %c0_i32, %c0_i32_0 : i32, i32
  }
  func.func @transform_4(%arg0: i32, %arg1: i32) -> (i32, i32) {
    %c0_i32 = arith.constant 0 : i32
    %c0_i32_0 = arith.constant 0 : i32
    return %arg0, %c0_i32 : i32, i32
  }
  func.func @transform_5(%arg0: i32, %arg1: i32) -> (i32, i32) {
    %c0_i32 = arith.constant 0 : i32
    %c0_i32_0 = arith.constant 0 : i32
    return %arg0, %c0_i32 : i32, i32
  }
  func.func @transform_6(%arg0: i32, %arg1: i32) -> (i32, i32) {
    %c0_i32 = arith.constant 0 : i32
    %c0_i32_0 = arith.constant 0 : i32
    %c0_i32_1 = arith.constant 0 : i32
    return %c0_i32, %c0_i32_0 : i32, i32
  }
  func.func @transform_7(%arg0: i32, %arg1: i32) -> (i32, i32) {
    %c0_i32 = arith.constant 0 : i32
    %c0_i32_0 = arith.constant 0 : i32
    %c0_i32_1 = arith.constant 0 : i32
    return %c0_i32, %c0_i32_0 : i32, i32
  }
  func.func @transform_8(%arg0: i32, %arg1: i32) -> (i32, i32) {
    %c0_i32 = arith.constant 0 : i32
    %c0_i32_0 = arith.constant 0 : i32
    return %arg0, %c0_i32 : i32, i32
  }
  func.func @transform_9(%arg0: i32, %arg1: i32) -> (i32, i32) {
    %c0_i32 = arith.constant 0 : i32
    %c0_i32_0 = arith.constant 0 : i32
    return %arg0, %c0_i32 : i32, i32
  }
  func.func @transform_10(%arg0: i32, %arg1: i32) -> (i32, i32) {
    %c0_i32 = arith.constant 0 : i32
    %c0_i32_0 = arith.constant 0 : i32
    return %arg0, %c0_i32 : i32, i32
  }
}

</mosaic_0001>

<llo_original>
// kernel: sentiment_rnn_forward.3
$region0: #{sentiment_rnn_forward.3}
  #allocation0 [shape = 'u32[]', space=smem, size = 0x4, offset = 0x4, fixed_abs, tag = 'smem constant byte address 0x4 - core index']
  #allocation1 [shape = 'u32[144,128]{1,0:T(1,128)}', space=vmem, size = 0x12000, scoped, tag = 'internal scratch']
  #allocation2 [shape = 'f32[8,32]{1,0:T(8,128)}', space=vmem, size = 0x1000, scoped, tag = 'scratch operand']
  #allocation3 [shape = 'f32[8,32]{1,0:T(8,128)}', space=vmem, size = 0x1000, scoped, tag = 'scratch operand']
  #allocation4 [shape = 'f32[4,8,128]{2,1,0:T(8,128)}', space=vmem, size = 0x4000, scoped, tag = 'scratch operand']
  %s0 = inlined_call_operand.vmem [shape: f32[8,8,32], index: 0, kind: input, shape index: {}]
  %s1 = inlined_call_operand.vmem [shape: f32[32,128], index: 1, kind: input, shape index: {}]
  %s2 = inlined_call_operand.vmem [shape: f32[32,128], index: 2, kind: input, shape index: {}]
  %s3 = inlined_call_operand.vmem [shape: f32[1,128], index: 3, kind: input, shape index: {}]
  %s4 = inlined_call_operand.vmem [shape: f32[8,32], index: 4, kind: input, shape index: {}]
  %s5 = inlined_call_operand.vmem [shape: f32[8,32], index: 5, kind: input, shape index: {}]
  %s6 = inlined_call_operand.vmem [shape: f32[32,2], index: 6, kind: input, shape index: {}]
  %s7 = inlined_call_operand.vmem [shape: f32[1,2], index: 7, kind: input, shape index: {}]
  %s8 = inlined_call_operand.vmem [shape: f32[8,2], index: 8, kind: output, shape index: {0}]
  %s9 = inlined_call_operand.vmem [shape: f32[8,32], index: 9, kind: output, shape index: {1}]
  %s10 = inlined_call_operand.vmem [shape: f32[8,32], index: 10, kind: output, shape index: {2}]
  %11 = xla_tuple %s8, %s9, %s10
  %s12 = sld [smem:[#allocation0]]
  $region89: #{sentiment_rnn_forward.3} parent=0
    _
  %s14 = ssub.s32 1, %s12
  %s15 = scalar_select 0, %s14, %s12
  loop: start=0, step=1, limit=4
  $region2: #{sentiment_rnn_forward.3} parent=0 // loop_pre_header
    _
  $region3: #{sentiment_rnn_forward.3} parent=0 // loop_header
    %s17 = sphi 0, %s21
    %p18 = scmp.ge.s32.totalorder %s17, 4
    %s24 = sphi 0, %s36
    %s25 = sphi 0, %s32
    %s26 = sphi 0, %s24
    %s27 = sphi 0, %s25
    %s28 = sphi 0, %s26
    %s29 = sphi 0, %s27
    %s41 = sphi 0, %s43
    %s44 = sphi 0, %s41
    %s45 = sphi 0, %s44
    %s61 = sphi 0, %s45
    %s65 = sphi 0, %s65
    %s67 = sphi 0, %s65
    %s68 = sphi 0, %s67
    %s82 = sphi 0, %s68
    %s86 = sphi 0, %s86
    %s88 = sphi 0, %s86
    %s89 = sphi 0, %s88
    %s103 = sphi 0, %s89
    %s107 = sphi 0, %s107
    %s109 = sphi 0, %s107
    %s110 = sphi 0, %s109
    %s124 = sphi 0, %s110
    %s130 = sphi 0, %s132
    %s133 = sphi 0, %s130
    %s134 = sphi 0, %s133
    %s150 = sphi 0, %s134
    %s156 = sphi 0, %s158
    %s159 = sphi 0, %s156
    %s160 = sphi 0, %s159
    %s176 = sphi 0, %s160
    %s180 = sphi 0, %s180
    %s182 = sphi 0, %s180
    %s183 = sphi 0, %s182
    %s197 = sphi 0, %s183
    %s201 = sphi 0, %s201
    %s203 = sphi 0, %s201
    %s204 = sphi 0, %s203
    %s218 = sphi 0, %s204
    %s224 = sphi 0, %s226
    %s227 = sphi 0, %s224
    %s228 = sphi 0, %s227
    %s244 = sphi 0, %s228
    %s250 = sphi 0, %s252
    %s253 = sphi 0, %s250
    %s254 = sphi 0, %s253
    %s270 = sphi 0, %s254
    %s276 = sphi 0, %s278
    %s279 = sphi 0, %s276
    %s280 = sphi 0, %s279
    %s296 = sphi 0, %s280
  $region4: #{sentiment_rnn_forward.3} parent=0 // loop_header_branch
    %20 = sbr.rel (%p18) target = $region8
  $region5: #{sentiment_rnn_forward.3} parent=0 // loop_body
    %s22 = ssub.s32 %s17, 1
    %s23 = ssub.s32 %s17, 2
    %s30 = sadd.s32 1, %s25
    %p31 = scmp.ge.s32.totalorder %s30, 2
    %s32 = scalar_select %p31, 0, %s30
    %s33 = sadd.s32 1, %s24
    %s34 = scalar_select %p31, %s33, %s24
    %p35 = scmp.ge.s32.totalorder %s34, 1
    %s36 = scalar_select %p35, 0, %s34
    %s37 = ssub.s32 %s25, %s32
    %s38 = ssub.s32 %s24, %s36
    %s39 = sor.u32 %s37, %s38
    %p40 = scmp.eq.s32.totalorder %s39, 0
    %s42 = sadd.s32 %s41, 1
    %s43 = scalar_select %p40, %s41, %s42
    %p46 = pneg %p40
    %p47 = scmp.eq.s32.totalorder %s17, 1
    %p48 = por %p46, %p47
    %p49 = scmp.ne.s32.totalorder %s41, %s44
    %p50 = scmp.eq.s32.totalorder %s17, 0
    %p51 = por %p49, %p50
    %p52 = scmp.ne.s32.totalorder %s41, %s44
    %p53 = scmp.eq.s32.totalorder %s22, 1
    %p54 = por %p52, %p53
    %p55 = scmp.ne.s32.totalorder %s44, %s45
    %p56 = scmp.eq.s32.totalorder %s22, 0
    %p57 = por %p55, %p56
    %p58 = scmp.ne.s32.totalorder %s44, %s45
    %p59 = scmp.eq.s32.totalorder %s23, 1
    %p60 = por %p58, %p59
    %p62 = scmp.ne.s32.totalorder %s45, %s61
    %p63 = scmp.eq.s32.totalorder %s23, 0
    %p64 = por %p62, %p63
    %s66 = sadd.s32 %s65, 1
    %p69 = scmp.eq.s32.totalorder %s17, 1
    %p70 = scmp.ne.s32.totalorder %s65, %s67
    %p71 = scmp.eq.s32.totalorder %s17, 0
    %p72 = por %p70, %p71
    %p73 = scmp.ne.s32.totalorder %s65, %s67
    %p74 = scmp.eq.s32.totalorder %s22, 1
    %p75 = por %p73, %p74
    %p76 = scmp.ne.s32.totalorder %s67, %s68
    %p77 = scmp.eq.s32.totalorder %s22, 0
    %p78 = por %p76, %p77
    %p79 = scmp.ne.s32.totalorder %s67, %s68
    %p80 = scmp.eq.s32.totalorder %s23, 1
    %p81 = por %p79, %p80
    %p83 = scmp.ne.s32.totalorder %s68, %s82
    %p84 = scmp.eq.s32.totalorder %s23, 0
    %p85 = por %p83, %p84
    %s87 = sadd.s32 %s86, 1
    %p90 = scmp.eq.s32.totalorder %s17, 1
    %p91 = scmp.ne.s32.totalorder %s86, %s88
    %p92 = scmp.eq.s32.totalorder %s17, 0
    %p93 = por %p91, %p92
    %p94 = scmp.ne.s32.totalorder %s86, %s88
    %p95 = scmp.eq.s32.totalorder %s22, 1
    %p96 = por %p94, %p95
    %p97 = scmp.ne.s32.totalorder %s88, %s89
    %p98 = scmp.eq.s32.totalorder %s22, 0
    %p99 = por %p97, %p98
    %p100 = scmp.ne.s32.totalorder %s88, %s89
    %p101 = scmp.eq.s32.totalorder %s23, 1
    %p102 = por %p100, %p101
    %p104 = scmp.ne.s32.totalorder %s89, %s103
    %p105 = scmp.eq.s32.totalorder %s23, 0
    %p106 = por %p104, %p105
    %s108 = sadd.s32 %s107, 1
    %p111 = scmp.eq.s32.totalorder %s17, 1
    %p112 = scmp.ne.s32.totalorder %s107, %s109
    %p113 = scmp.eq.s32.totalorder %s17, 0
    %p114 = por %p112, %p113
    %p115 = scmp.ne.s32.totalorder %s107, %s109
    %p116 = scmp.eq.s32.totalorder %s22, 1
    %p117 = por %p115, %p116
    %p118 = scmp.ne.s32.totalorder %s109, %s110
    %p119 = scmp.eq.s32.totalorder %s22, 0
    %p120 = por %p118, %p119
    %p121 = scmp.ne.s32.totalorder %s109, %s110
    %p122 = scmp.eq.s32.totalorder %s23, 1
    %p123 = por %p121, %p122
    %p125 = scmp.ne.s32.totalorder %s110, %s124
    %p126 = scmp.eq.s32.totalorder %s23, 0
    %p127 = por %p125, %p126
    %s128 = ssub.s32 %s24, %s36
    %p129 = scmp.eq.s32.totalorder %s128, 0
    %s131 = sadd.s32 %s130, 1
    %s132 = scalar_select %p129, %s130, %s131
    %p135 = pneg %p129
    %p136 = scmp.eq.s32.totalorder %s17, 1
    %p137 = por %p135, %p136
    %p138 = scmp.ne.s32.totalorder %s130, %s133
    %p139 = scmp.eq.s32.totalorder %s17, 0
    %p140 = por %p138, %p139
    %p141 = scmp.ne.s32.totalorder %s130, %s133
    %p142 = scmp.eq.s32.totalorder %s22, 1
    %p143 = por %p141, %p142
    %p144 = scmp.ne.s32.totalorder %s133, %s134
    %p145 = scmp.eq.s32.totalorder %s22, 0
    %p146 = por %p144, %p145
    %p147 = scmp.ne.s32.totalorder %s133, %s134
    %p148 = scmp.eq.s32.totalorder %s23, 1
    %p149 = por %p147, %p148
    %p151 = scmp.ne.s32.totalorder %s134, %s150
    %p152 = scmp.eq.s32.totalorder %s23, 0
    %p153 = por %p151, %p152
    %s154 = ssub.s32 %s24, %s36
    %p155 = scmp.eq.s32.totalorder %s154, 0
    %s157 = sadd.s32 %s156, 1
    %s158 = scalar_select %p155, %s156, %s157
    %p161 = pneg %p155
    %p162 = scmp.eq.s32.totalorder %s17, 1
    %p163 = por %p161, %p162
    %p164 = scmp.ne.s32.totalorder %s156, %s159
    %p165 = scmp.eq.s32.totalorder %s17, 0
    %p166 = por %p164, %p165
    %p167 = scmp.ne.s32.totalorder %s156, %s159
    %p168 = scmp.eq.s32.totalorder %s22, 1
    %p169 = por %p167, %p168
    %p170 = scmp.ne.s32.totalorder %s159, %s160
    %p171 = scmp.eq.s32.totalorder %s22, 0
    %p172 = por %p170, %p171
    %p173 = scmp.ne.s32.totalorder %s159, %s160
    %p174 = scmp.eq.s32.totalorder %s23, 1
    %p175 = por %p173, %p174
    %p177 = scmp.ne.s32.totalorder %s160, %s176
    %p178 = scmp.eq.s32.totalorder %s23, 0
    %p179 = por %p177, %p178
    %s181 = sadd.s32 %s180, 1
    %p184 = scmp.eq.s32.totalorder %s17, 1
    %p185 = scmp.ne.s32.totalorder %s180, %s182
    %p186 = scmp.eq.s32.totalorder %s17, 0
    %p187 = por %p185, %p186
    %p188 = scmp.ne.s32.totalorder %s180, %s182
    %p189 = scmp.eq.s32.totalorder %s22, 1
    %p190 = por %p188, %p189
    %p191 = scmp.ne.s32.totalorder %s182, %s183
    %p192 = scmp.eq.s32.totalorder %s22, 0
    %p193 = por %p191, %p192
    %p194 = scmp.ne.s32.totalorder %s182, %s183
    %p195 = scmp.eq.s32.totalorder %s23, 1
    %p196 = por %p194, %p195
    %p198 = scmp.ne.s32.totalorder %s183, %s197
    %p199 = scmp.eq.s32.totalorder %s23, 0
    %p200 = por %p198, %p199
    %s202 = sadd.s32 %s201, 1
    %p205 = scmp.eq.s32.totalorder %s17, 1
    %p206 = scmp.ne.s32.totalorder %s201, %s203
    %p207 = scmp.eq.s32.totalorder %s17, 0
    %p208 = por %p206, %p207
    %p209 = scmp.ne.s32.totalorder %s201, %s203
    %p210 = scmp.eq.s32.totalorder %s22, 1
    %p211 = por %p209, %p210
    %p212 = scmp.ne.s32.totalorder %s203, %s204
    %p213 = scmp.eq.s32.totalorder %s22, 0
    %p214 = por %p212, %p213
    %p215 = scmp.ne.s32.totalorder %s203, %s204
    %p216 = scmp.eq.s32.totalorder %s23, 1
    %p217 = por %p215, %p216
    %p219 = scmp.ne.s32.totalorder %s204, %s218
    %p220 = scmp.eq.s32.totalorder %s23, 0
    %p221 = por %p219, %p220
    %s222 = ssub.s32 %s24, %s36
    %p223 = scmp.eq.s32.totalorder %s222, 0
    %s225 = sadd.s32 %s224, 1
    %s226 = scalar_select %p223, %s224, %s225
    %p229 = pneg %p223
    %p230 = scmp.eq.s32.totalorder %s17, 1
    %p231 = por %p229, %p230
    %p232 = scmp.ne.s32.totalorder %s224, %s227
    %p233 = scmp.eq.s32.totalorder %s17, 0
    %p234 = por %p232, %p233
    %p235 = scmp.ne.s32.totalorder %s224, %s227
    %p236 = scmp.eq.s32.totalorder %s22, 1
    %p237 = por %p235, %p236
    %p238 = scmp.ne.s32.totalorder %s227, %s228
    %p239 = scmp.eq.s32.totalorder %s22, 0
    %p240 = por %p238, %p239
    %p241 = scmp.ne.s32.totalorder %s227, %s228
    %p242 = scmp.eq.s32.totalorder %s23, 1
    %p243 = por %p241, %p242
    %p245 = scmp.ne.s32.totalorder %s228, %s244
    %p246 = scmp.eq.s32.totalorder %s23, 0
    %p247 = por %p245, %p246
    %s248 = ssub.s32 %s24, %s36
    %p249 = scmp.eq.s32.totalorder %s248, 0
    %s251 = sadd.s32 %s250, 1
    %s252 = scalar_select %p249, %s250, %s251
    %p255 = pneg %p249
    %p256 = scmp.eq.s32.totalorder %s17, 1
    %p257 = por %p255, %p256
    %p258 = scmp.ne.s32.totalorder %s250, %s253
    %p259 = scmp.eq.s32.totalorder %s17, 0
    %p260 = por %p258, %p259
    %p261 = scmp.ne.s32.totalorder %s250, %s253
    %p262 = scmp.eq.s32.totalorder %s22, 1
    %p263 = por %p261, %p262
    %p264 = scmp.ne.s32.totalorder %s253, %s254
    %p265 = scmp.eq.s32.totalorder %s22, 0
    %p266 = por %p264, %p265
    %p267 = scmp.ne.s32.totalorder %s253, %s254
    %p268 = scmp.eq.s32.totalorder %s23, 1
    %p269 = por %p267, %p268
    %p271 = scmp.ne.s32.totalorder %s254, %s270
    %p272 = scmp.eq.s32.totalorder %s23, 0
    %p273 = por %p271, %p272
    %s274 = ssub.s32 %s24, %s36
    %p275 = scmp.eq.s32.totalorder %s274, 0
    %s277 = sadd.s32 %s276, 1
    %s278 = scalar_select %p275, %s276, %s277
    %p281 = pneg %p275
    %p282 = scmp.eq.s32.totalorder %s17, 1
    %p283 = por %p281, %p282
    %p284 = scmp.ne.s32.totalorder %s276, %s279
    %p285 = scmp.eq.s32.totalorder %s17, 0
    %p286 = por %p284, %p285
    %p287 = scmp.ne.s32.totalorder %s276, %s279
    %p288 = scmp.eq.s32.totalorder %s22, 1
    %p289 = por %p287, %p288
    %p290 = scmp.ne.s32.totalorder %s279, %s280
    %p291 = scmp.eq.s32.totalorder %s22, 0
    %p292 = por %p290, %p291
    %p293 = scmp.ne.s32.totalorder %s279, %s280
    %p294 = scmp.eq.s32.totalorder %s23, 1
    %p295 = por %p293, %p294
    %p297 = scmp.ne.s32.totalorder %s280, %s296
    %p298 = scmp.eq.s32.totalorder %s23, 0
    %p299 = por %p297, %p298
    %p300 = scmp.le.s32.totalorder 1, %s17
    %p301 = scmp.lt.s32.totalorder %s17, 3
    %p302 = pnand %p300, %p301
    %p303 = pneg %p302
    // Predicated region
    $region9: #{sentiment_rnn_forward.3} parent=5 // pred_check
      _
    $region10: #{sentiment_rnn_forward.3} parent=5 // pred_check_branch
      %305 = sbr.rel (%p302) target = $region12
    $region11: #{sentiment_rnn_forward.3} parent=5 // pred_region
      %s306 = ssub.s32 %s17, 1
      // Predicated region
      $region13: #{sentiment_rnn_forward.3} parent=11 // pred_check
        %p307 = pneg %p78
      $region14: #{sentiment_rnn_forward.3} parent=11 // pred_check_branch
        %309 = sbr.rel (%p307) target = $region16
      $region15: #{sentiment_rnn_forward.3} parent=11 // pred_region
        _
      $region16: #{sentiment_rnn_forward.3} parent=11 // pred_fallthru
        _
      // Predicated region
      $region17: #{sentiment_rnn_forward.3} parent=11 // pred_check
        %p310 = pneg %p99
      $region18: #{sentiment_rnn_forward.3} parent=11 // pred_check_branch
        %312 = sbr.rel (%p310) target = $region20
      $region19: #{sentiment_rnn_forward.3} parent=11 // pred_region
        _
      $region20: #{sentiment_rnn_forward.3} parent=11 // pred_fallthru
        _
      // Predicated region
      $region21: #{sentiment_rnn_forward.3} parent=11 // pred_check
        %p313 = pneg %p120
      $region22: #{sentiment_rnn_forward.3} parent=11 // pred_check_branch
        %315 = sbr.rel (%p313) target = $region24
      $region23: #{sentiment_rnn_forward.3} parent=11 // pred_region
        _
      $region24: #{sentiment_rnn_forward.3} parent=11 // pred_fallthru
        _
      // Predicated region
      $region25: #{sentiment_rnn_forward.3} parent=11 // pred_check
        %p316 = pneg %p146
      $region26: #{sentiment_rnn_forward.3} parent=11 // pred_check_branch
        %318 = sbr.rel (%p316) target = $region28
      $region27: #{sentiment_rnn_forward.3} parent=11 // pred_region
        %p319 = scmp.lt.s32.totalorder %s26, 0
        %s320 = scalar_select %p319, %s26, 0
        %s321 = smul.addr %s320, 8
        %s322 = scalar_lea.vmem %s4, %s321
      $region28: #{sentiment_rnn_forward.3} parent=11 // pred_fallthru
        _
      // Predicated region
      $region29: #{sentiment_rnn_forward.3} parent=11 // pred_check
        %p323 = pneg %p172
      $region30: #{sentiment_rnn_forward.3} parent=11 // pred_check_branch
        %325 = sbr.rel (%p323) target = $region32
      $region31: #{sentiment_rnn_forward.3} parent=11 // pred_region
        %p326 = scmp.lt.s32.totalorder %s26, 0
        %s327 = scalar_select %p326, %s26, 0
        %s328 = smul.addr %s327, 8
        %s329 = scalar_lea.vmem %s5, %s328
      $region32: #{sentiment_rnn_forward.3} parent=11 // pred_fallthru
        _
      // Predicated region
      $region33: #{sentiment_rnn_forward.3} parent=11 // pred_check
        %p330 = pneg %p193
      $region34: #{sentiment_rnn_forward.3} parent=11 // pred_check_branch
        %332 = sbr.rel (%p330) target = $region36
      $region35: #{sentiment_rnn_forward.3} parent=11 // pred_region
        _
      $region36: #{sentiment_rnn_forward.3} parent=11 // pred_fallthru
        _
      // Predicated region
      $region37: #{sentiment_rnn_forward.3} parent=11 // pred_check
        %p333 = pneg %p214
      $region38: #{sentiment_rnn_forward.3} parent=11 // pred_check_branch
        %335 = sbr.rel (%p333) target = $region40
      $region39: #{sentiment_rnn_forward.3} parent=11 // pred_region
        _
      $region40: #{sentiment_rnn_forward.3} parent=11 // pred_fallthru
        _
    $region12: #{sentiment_rnn_forward.3} parent=5 // pred_fallthru
      _
    %p336 = scmp.lt.s32.totalorder %s17, 2
    // Predicated region
    $region41: #{sentiment_rnn_forward.3} parent=5 // pred_check
      %p337 = pneg %p336
    $region42: #{sentiment_rnn_forward.3} parent=5 // pred_check_branch
      %339 = sbr.rel (%p337) target = $region44
    $region43: #{sentiment_rnn_forward.3} parent=5 // pred_region
      // Predicated region
      $region45: #{sentiment_rnn_forward.3} parent=43 // pred_check
        %p340 = pneg %p51
      $region46: #{sentiment_rnn_forward.3} parent=43 // pred_check_branch
        %342 = sbr.rel (%p340) target = $region48
      $region47: #{sentiment_rnn_forward.3} parent=43 // pred_region
        %s343 = smul.u32 4, %s25
        %p344 = scmp.lt.s32.totalorder %s343, 7
        %s345 = scalar_select %p344, %s343, 7
        %p346 = scmp.lt.s32.totalorder %s24, 0
        %s347 = scalar_select %p346, %s24, 0
        %s348 = sadd.s32 %s347, %s345
        %s349 = smul.addr %s348, 8
        %s350 = scalar_lea.vmem %s0, %s349
        %s351 = smul.u32 4, %s25
      $region48: #{sentiment_rnn_forward.3} parent=43 // pred_fallthru
        _
    $region44: #{sentiment_rnn_forward.3} parent=5 // pred_fallthru
      _
    %p352 = scmp.le.s32.totalorder 1, %s17
    %p353 = scmp.lt.s32.totalorder %s17, 3
    %p354 = pnand %p352, %p353
    %p355 = pneg %p354
    // Predicated region
    $region49: #{sentiment_rnn_forward.3} parent=5 // pred_check
      _
    $region50: #{sentiment_rnn_forward.3} parent=5 // pred_check_branch
      %357 = sbr.rel (%p354) target = $region52
    $region51: #{sentiment_rnn_forward.3} parent=5 // pred_region
      %s358 = ssub.s32 %s17, 1
      %s359 = smul.u32 4, %s27
      %p360 = scmp.lt.s32.totalorder %s359, 7
      %s361 = scalar_select %p360, %s359, 7
      %p362 = scmp.lt.s32.totalorder %s26, 0
      %s363 = scalar_select %p362, %s26, 0
      %s364 = sadd.s32 %s363, %s361
      %s365 = smul.addr %s364, 8
      %s366 = scalar_lea.vmem %s0, %s365
      %p367 = pneg %p57
      %p368 = pneg %p54
      %p369 = pneg %p78
      %p370 = pneg %p75
      %p371 = pneg %p99
      %p372 = pneg %p96
      %p373 = pneg %p120
      %p374 = pneg %p117
      %p375 = scmp.lt.s32.totalorder %s26, 0
      %s376 = scalar_select %p375, %s26, 0
      %s377 = smul.addr %s376, 8
      %s378 = scalar_lea.vmem %s4, %s377
      %p379 = pneg %p146
      %p380 = pneg %p143
      %p381 = scmp.lt.s32.totalorder %s26, 0
      %s382 = scalar_select %p381, %s26, 0
      %s383 = smul.addr %s382, 8
      %s384 = scalar_lea.vmem %s5, %s383
      %p385 = pneg %p172
      %p386 = pneg %p169
      %p387 = pneg %p193
      %p388 = pneg %p190
      %p389 = pneg %p214
      %p390 = pneg %p211
      %p391 = pneg %p240
      %p392 = pneg %p237
      %p393 = scmp.lt.s32.totalorder %s26, 0
      %s394 = scalar_select %p393, %s26, 0
      %s395 = smul.addr %s394, 8
      %s396 = scalar_lea.vmem %s8, %s395
      %p397 = pneg %p266
      %p398 = pneg %p263
      %p399 = scmp.lt.s32.totalorder %s26, 0
      %s400 = scalar_select %p399, %s26, 0
      %s401 = smul.addr %s400, 8
      %s402 = scalar_lea.vmem %s9, %s401
      %p403 = pneg %p292
      %p404 = pneg %p289
      %p405 = scmp.lt.s32.totalorder %s26, 0
      %s406 = scalar_select %p405, %s26, 0
      %s407 = smul.addr %s406, 8
      %s408 = scalar_lea.vmem %s10, %s407
      %s409 = smul.u32 4, %s27
      %p410 = scmp.lt.s32.totalorder %s409, 7
      %s411 = scalar_select %p410, %s409, 7
      %p412 = scmp.lt.s32.totalorder %s26, 0
      %s413 = scalar_select %p412, %s26, 0
      %s414 = sadd.s32 %s413, %s411
      %s415 = smul.addr %s414, 8
      %s416 = scalar_lea.vmem %s0, %s415
      %s417 = smul.u32 4, %s27
      %p418 = scmp.lt.s32.totalorder %s26, 0
      %s419 = scalar_select %p418, %s26, 0
      %s420 = smul.addr %s419, 8
      %s421 = scalar_lea.vmem %s4, %s420
      %p422 = scmp.lt.s32.totalorder %s26, 0
      %s423 = scalar_select %p422, %s26, 0
      %s424 = smul.addr %s423, 8
      %s425 = scalar_lea.vmem %s5, %s424
      %p426 = scmp.lt.s32.totalorder %s26, 0
      %s427 = scalar_select %p426, %s26, 0
      %s428 = smul.addr %s427, 8
      %s429 = scalar_lea.vmem %s8, %s428
      %p430 = scmp.lt.s32.totalorder %s26, 0
      %s431 = scalar_select %p430, %s26, 0
      %s432 = smul.addr %s431, 8
      %s433 = scalar_lea.vmem %s9, %s432
      %p434 = scmp.lt.s32.totalorder %s26, 0
      %s435 = scalar_select %p434, %s26, 0
      %s436 = smul.addr %s435, 8
      %s437 = scalar_lea.vmem %s10, %s436
      %p438 = scmp.eq.s32.totalorder %s27, 0
      // Predicated region
      $region53: #{sentiment_rnn_forward.3} parent=51 // pred_check
        %p439 = pneg %p438
      $region54: #{sentiment_rnn_forward.3} parent=51 // pred_check_branch
        %441 = sbr.rel (%p439) target = $region56
      $region55: #{sentiment_rnn_forward.3} parent=51 // pred_region
        %v442 = vld [vmem:[%s421] sm:$0xff]
        %vm443 = vcmask 261120
        %444 = vst.msk [vmem:[#allocation2] sm:$0xff] %vm443, %v442
        %v445 = vld [vmem:[%s425] sm:$0xff]
        %446 = vst.msk [vmem:[#allocation3] sm:$0xff] %vm443, %v445
      $region56: #{sentiment_rnn_forward.3} parent=51 // pred_fallthru
        _
      %v447 = vld [vmem:[%s416] sm:$0xff]
      %v448 = vld [vmem:[%s416 + $0x8] sm:$0xff]
      %v449 = vld [vmem:[%s416 + $0x10] sm:$0xff]
      %v450 = vld [vmem:[%s416 + $0x18] sm:$0xff]
      %v451 = vld [vmem:[%s1] sm:$0xff]
      %v452 = vld [vmem:[%s1 + $0x8] sm:$0xff]
      %v453 = vld [vmem:[%s1 + $0x10] sm:$0xff]
      %v454 = vld [vmem:[%s1 + $0x18] sm:$0xff]
      %v455 = vld [vmem:[%s3] sm:$0x1]
      %v457 = vlaneseq
      %v458 = vshrl.u32 %v457, 7
      %v459 = vsub.s32 0, %v458
      %v460 = vrot.slane %v455, %v459
      %vm462 = vcmask 261120
      %v464 = vsel %vm462, %v447, 0
      %v467 = vsel %vm462, %v448, 0
      %v470 = vsel %vm462, %v449, 0
      %v473 = vsel %vm462, %v450, 0
      %475 = vmatprep.subr.mxu0 0.0
      %476 = vmatpush1.msra.mxu0 %v451
      %477 = vmatprep.subr.mxu0 0.0
      %478 = vmatpush1.msra.mxu0 %v452
      %479 = vmatprep.subr.mxu0 0.0
      %480 = vmatpush1.msra.mxu0 %v453
      %481 = vmatprep.subr.mxu0 0.0
      %482 = vmatpush1.msra.mxu0 %v454
      %483 = vmatprep.subr.mxu0 0.0
      %484 = vmatpush1.msra.mxu0 0.0
      %485 = vmatprep.subr.mxu0 0.0
      %486 = vmatpush1.msra.mxu0 0.0
      %487 = vmatprep.subr.mxu0 0.0
      %488 = vmatpush1.msra.mxu0 0.0
      %489 = vmatprep.subr.mxu0 0.0
      %490 = vmatpush1.msra.mxu0 0.0
      %491 = vmatprep.subr.mxu0 0.0
      %492 = vmatpush1.msra.mxu0 0.0
      %493 = vmatprep.subr.mxu0 0.0
      %494 = vmatpush1.msra.mxu0 0.0
      %495 = vmatprep.subr.mxu0 0.0
      %496 = vmatpush1.msra.mxu0 0.0
      %497 = vmatprep.subr.mxu0 0.0
      %498 = vmatpush1.msra.mxu0 0.0
      %499 = vmatprep.subr.mxu0 0.0
      %500 = vmatpush1.msra.mxu0 0.0
      %501 = vmatprep.subr.mxu0 0.0
      %502 = vmatpush1.msra.mxu0 0.0
      %503 = vmatprep.subr.mxu0 0.0
      %504 = vmatpush1.msra.mxu0 0.0
      %505 = vmatprep.subr.mxu0 0.0
      %506 = vmatpush1.msra.mxu0 0.0
      %507 = vmatprep.subr.mxu0 0.0
      %508 = vmatpush1.msra.mxu0 0.0
      %509 = vmatprep.subr.mxu0 0.0
      %510 = vmatpush1.msra.mxu0 0.0
      %511 = vmatprep.subr.mxu0 0.0
      %512 = vmatpush1.msra.mxu0 0.0
      %513 = vmatprep.subr.mxu0 0.0
      %514 = vmatpush1.msra.mxu0 0.0
      %515 = vmatprep.subr.mxu0 0.0
      %516 = vmatpush1.msra.mxu0 0.0
      %517 = vmatprep.subr.mxu0 0.0
      %518 = vmatpush1.msra.mxu0 0.0
      %519 = vmatprep.subr.mxu0 0.0
      %520 = vmatpush1.msra.mxu0 0.0
      %521 = vmatprep.subr.mxu0 0.0
      %522 = vmatpush1.msra.mxu0 0.0
      %523 = vmatprep.subr.mxu0 0.0
      %524 = vmatpush1.msra.mxu0 0.0
      %525 = vmatprep.subr.mxu0 0.0
      %526 = vmatpush1.msra.mxu0 0.0
      %527 = vmatprep.subr.mxu0 0.0
      %528 = vmatpush1.msra.mxu0 0.0
      %529 = vmatprep.subr.mxu0 0.0
      %530 = vmatpush1.msra.mxu0 0.0
      %531 = vmatprep.subr.mxu0 0.0
      %532 = vmatpush1.msra.mxu0 0.0
      %533 = vmatprep.subr.mxu0 0.0
      %534 = vmatpush1.msra.mxu0 0.0
      %535 = vmatprep.subr.mxu0 0.0
      %536 = vmatpush1.msra.mxu0 0.0
      %537 = vmatprep.subr.mxu0 0.0
      %538 = vmatpush1.msra.mxu0 0.0
      %539 = vmatprep.mubr.f32.mxu0 0.0
      %540 = vmatmul.mubr.f32.gmra.mrb[0].mxu0 %v464
      %v541 = vpop.f32.mrb[0].mxu0
      %v542 = vadd.f32 %v460, %v541
      %v543 = vpop.f32.mrb[0].mxu0
      %544 = vmatprep.mubr.f32.mxu0 0.0
      %545 = vmatmul.mubr.f32.gmra.mrb[0].mxu0 %v467
      %v546 = vpop.f32.mrb[0].mxu0
      %v547 = vadd.f32 %v460, %v546
      %v548 = vpop.f32.mrb[0].mxu0
      %549 = vmatprep.mubr.f32.mxu0 0.0
      %550 = vmatmul.mubr.f32.gmra.mrb[0].mxu0 %v470
      %v551 = vpop.f32.mrb[0].mxu0
      %v552 = vadd.f32 %v460, %v551
      %v553 = vpop.f32.mrb[0].mxu0
      %554 = vmatprep.mubr.f32.mxu0 0.0
      %555 = vmatmul.mubr.f32.gmra.mrb[0].mxu0 %v473
      %v556 = vpop.f32.mrb[0].mxu0
      %v557 = vadd.f32 %v460, %v556
      %v558 = vpop.f32.mrb[0].mxu0
      %559 = vdwg.mxu0
      %560 = vst [vmem:[#allocation4] sm:$0xff] %v542
      %561 = vst [vmem:[#allocation4 + $0x8] sm:$0xff] %v547
      %562 = vst [vmem:[#allocation4 + $0x10] sm:$0xff] %v552
      %563 = vst [vmem:[#allocation4 + $0x18] sm:$0xff] %v557
      %v564 = vld [vmem:[%s2] sm:$0xff]
      %v565 = vld [vmem:[%s2 + $0x8] sm:$0xff]
      %v566 = vld [vmem:[%s2 + $0x10] sm:$0xff]
      %v567 = vld [vmem:[%s2 + $0x18] sm:$0xff]
      %v568 = vld [vmem:[#allocation2] sm:$0xff]
      %v569 = vld [vmem:[#allocation3] sm:$0xff]
      %v570 = vld [vmem:[#allocation4] sm:$0xff]
      %v572 = vsel %vm462, %v568, 0
      %574 = vmatprep.subr.mxu0 0.0
      %575 = vmatpush1.msra.mxu0 %v564
      %576 = vmatprep.subr.mxu0 0.0
      %577 = vmatpush1.msra.mxu0 %v565
      %578 = vmatprep.subr.mxu0 0.0
      %579 = vmatpush1.msra.mxu0 %v566
      %580 = vmatprep.subr.mxu0 0.0
      %581 = vmatpush1.msra.mxu0 %v567
      %582 = vmatprep.subr.mxu0 0.0
      %583 = vmatpush1.msra.mxu0 0.0
      %584 = vmatprep.subr.mxu0 0.0
      %585 = vmatpush1.msra.mxu0 0.0
      %586 = vmatprep.subr.mxu0 0.0
      %587 = vmatpush1.msra.mxu0 0.0
      %588 = vmatprep.subr.mxu0 0.0
      %589 = vmatpush1.msra.mxu0 0.0
      %590 = vmatprep.subr.mxu0 0.0
      %591 = vmatpush1.msra.mxu0 0.0
      %592 = vmatprep.subr.mxu0 0.0
      %593 = vmatpush1.msra.mxu0 0.0
      %594 = vmatprep.subr.mxu0 0.0
      %595 = vmatpush1.msra.mxu0 0.0
      %596 = vmatprep.subr.mxu0 0.0
      %597 = vmatpush1.msra.mxu0 0.0
      %598 = vmatprep.subr.mxu0 0.0
      %599 = vmatpush1.msra.mxu0 0.0
      %600 = vmatprep.subr.mxu0 0.0
      %601 = vmatpush1.msra.mxu0 0.0
      %602 = vmatprep.subr.mxu0 0.0
      %603 = vmatpush1.msra.mxu0 0.0
      %604 = vmatprep.subr.mxu0 0.0
      %605 = vmatpush1.msra.mxu0 0.0
      %606 = vmatprep.subr.mxu0 0.0
      %607 = vmatpush1.msra.mxu0 0.0
      %608 = vmatprep.subr.mxu0 0.0
      %609 = vmatpush1.msra.mxu0 0.0
      %610 = vmatprep.subr.mxu0 0.0
      %611 = vmatpush1.msra.mxu0 0.0
      %612 = vmatprep.subr.mxu0 0.0
      %613 = vmatpush1.msra.mxu0 0.0
      %614 = vmatprep.subr.mxu0 0.0
      %615 = vmatpush1.msra.mxu0 0.0
      %616 = vmatprep.subr.mxu0 0.0
      %617 = vmatpush1.msra.mxu0 0.0
      %618 = vmatprep.subr.mxu0 0.0
      %619 = vmatpush1.msra.mxu0 0.0
      %620 = vmatprep.subr.mxu0 0.0
      %621 = vmatpush1.msra.mxu0 0.0
      %622 = vmatprep.subr.mxu0 0.0
      %623 = vmatpush1.msra.mxu0 0.0
      %624 = vmatprep.subr.mxu0 0.0
      %625 = vmatpush1.msra.mxu0 0.0
      %626 = vmatprep.subr.mxu0 0.0
      %627 = vmatpush1.msra.mxu0 0.0
      %628 = vmatprep.subr.mxu0 0.0
      %629 = vmatpush1.msra.mxu0 0.0
      %630 = vmatprep.subr.mxu0 0.0
      %631 = vmatpush1.msra.mxu0 0.0
      %632 = vmatprep.subr.mxu0 0.0
      %633 = vmatpush1.msra.mxu0 0.0
      %634 = vmatprep.subr.mxu0 0.0
      %635 = vmatpush1.msra.mxu0 0.0
      %636 = vmatprep.subr.mxu0 0.0
      %637 = vmatpush1.msra.mxu0 0.0
      %638 = vmatprep.mubr.f32.mxu0 0.0
      %639 = vmatmul.mubr.f32.gmra.mrb[0].mxu0 %v572
      %v640 = vpop.f32.mrb[0].mxu0
      %v641 = vadd.f32 0.0, %v640
      %v642 = vpop.f32.mrb[0].mxu0
      %643 = vdwg.mxu0
      %v644 = vadd.f32 %v570, %v641
      %v645 = vxor.u32 %v644, 2147483648
      %v646 = vmul.f32 %v645, 1.442695
      %v647 = vpow.pop %v646
      %v648 = vadd.f32 %v647, 1.0
      %v649 = vrcp.pop %v648
      %v650 = vmul.f32 1.0, %v649
      %v651 = vtanh.pop %v644
      %653 = vrot.lane.b32.xlu0 %v569, 32
      %v654 = vpop.permute.xlu0 %653
      %v656 = vmul.f32 %v650, %v654
      %658 = vrot.lane.b32.xlu0 %v651, 64
      %v659 = vpop.permute.xlu0 %658
      %v661 = vmul.f32 %v650, %v659
      %663 = vrot.lane.b32.xlu0 %v661, 32
      %v664 = vpop.permute.xlu0 %663
      %v666 = vadd.f32 %v656, %v664
      %v667 = vtanh.pop %v666
      %669 = vrot.lane.b32.xlu0 %v667, 64
      %v670 = vpop.permute.xlu0 %669
      %v672 = vmul.f32 %v650, %v670
      %s673 = scalar_lea.vmem [#allocation4], 8
      %v674 = vld [vmem:[%s673] sm:$0xff]
      %676 = vrot.lane.b32.xlu0 %v672, 32
      %v677 = vpop.permute.xlu0 %676
      %v678 = vsel %vm462, %v677, 0
      %680 = vmatprep.subr.mxu0 0.0
      %681 = vmatpush1.msra.mxu0 %v564
      %682 = vmatprep.subr.mxu0 0.0
      %683 = vmatpush1.msra.mxu0 %v565
      %684 = vmatprep.subr.mxu0 0.0
      %685 = vmatpush1.msra.mxu0 %v566
      %686 = vmatprep.subr.mxu0 0.0
      %687 = vmatpush1.msra.mxu0 %v567
      %688 = vmatprep.subr.mxu0 0.0
      %689 = vmatpush1.msra.mxu0 0.0
      %690 = vmatprep.subr.mxu0 0.0
      %691 = vmatpush1.msra.mxu0 0.0
      %692 = vmatprep.subr.mxu0 0.0
      %693 = vmatpush1.msra.mxu0 0.0
      %694 = vmatprep.subr.mxu0 0.0
      %695 = vmatpush1.msra.mxu0 0.0
      %696 = vmatprep.subr.mxu0 0.0
      %697 = vmatpush1.msra.mxu0 0.0
      %698 = vmatprep.subr.mxu0 0.0
      %699 = vmatpush1.msra.mxu0 0.0
      %700 = vmatprep.subr.mxu0 0.0
      %701 = vmatpush1.msra.mxu0 0.0
      %702 = vmatprep.subr.mxu0 0.0
      %703 = vmatpush1.msra.mxu0 0.0
      %704 = vmatprep.subr.mxu0 0.0
      %705 = vmatpush1.msra.mxu0 0.0
      %706 = vmatprep.subr.mxu0 0.0
      %707 = vmatpush1.msra.mxu0 0.0
      %708 = vmatprep.subr.mxu0 0.0
      %709 = vmatpush1.msra.mxu0 0.0
      %710 = vmatprep.subr.mxu0 0.0
      %711 = vmatpush1.msra.mxu0 0.0
      %712 = vmatprep.subr.mxu0 0.0
      %713 = vmatpush1.msra.mxu0 0.0
      %714 = vmatprep.subr.mxu0 0.0
      %715 = vmatpush1.msra.mxu0 0.0
      %716 = vmatprep.subr.mxu0 0.0
      %717 = vmatpush1.msra.mxu0 0.0
      %718 = vmatprep.subr.mxu0 0.0
      %719 = vmatpush1.msra.mxu0 0.0
      %720 = vmatprep.subr.mxu0 0.0
      %721 = vmatpush1.msra.mxu0 0.0
      %722 = vmatprep.subr.mxu0 0.0
      %723 = vmatpush1.msra.mxu0 0.0
      %724 = vmatprep.subr.mxu0 0.0
      %725 = vmatpush1.msra.mxu0 0.0
      %726 = vmatprep.subr.mxu0 0.0
      %727 = vmatpush1.msra.mxu0 0.0
      %728 = vmatprep.subr.mxu0 0.0
      %729 = vmatpush1.msra.mxu0 0.0
      %730 = vmatprep.subr.mxu0 0.0
      %731 = vmatpush1.msra.mxu0 0.0
      %732 = vmatprep.subr.mxu0 0.0
      %733 = vmatpush1.msra.mxu0 0.0
      %734 = vmatprep.subr.mxu0 0.0
      %735 = vmatpush1.msra.mxu0 0.0
      %736 = vmatprep.subr.mxu0 0.0
      %737 = vmatpush1.msra.mxu0 0.0
      %738 = vmatprep.subr.mxu0 0.0
      %739 = vmatpush1.msra.mxu0 0.0
      %740 = vmatprep.subr.mxu0 0.0
      %741 = vmatpush1.msra.mxu0 0.0
      %742 = vmatprep.subr.mxu0 0.0
      %743 = vmatpush1.msra.mxu0 0.0
      %744 = vmatprep.mubr.f32.mxu0 0.0
      %745 = vmatmul.mubr.f32.gmra.mrb[0].mxu0 %v678
      %v746 = vpop.f32.mrb[0].mxu0
      %v747 = vadd.f32 0.0, %v746
      %v748 = vpop.f32.mrb[0].mxu0
      %749 = vdwg.mxu0
      %v750 = vadd.f32 %v674, %v747
      %v751 = vxor.u32 %v750, 2147483648
      %v752 = vmul.f32 %v751, 1.442695
      %v753 = vpow.pop %v752
      %v754 = vadd.f32 %v753, 1.0
      %v755 = vrcp.pop %v754
      %v756 = vmul.f32 1.0, %v755
      %v757 = vtanh.pop %v750
      %v758 = vmul.f32 %v756, %v666
      %760 = vrot.lane.b32.xlu0 %v757, 64
      %v761 = vpop.permute.xlu0 %760
      %v763 = vmul.f32 %v756, %v761
      %765 = vrot.lane.b32.xlu0 %v763, 32
      %v766 = vpop.permute.xlu0 %765
      %v768 = vadd.f32 %v758, %v766
      %v769 = vtanh.pop %v768
      %771 = vrot.lane.b32.xlu0 %v769, 64
      %v772 = vpop.permute.xlu0 %771
      %v774 = vmul.f32 %v756, %v772
      %s775 = scalar_lea.vmem [#allocation4], 16
      %v776 = vld [vmem:[%s775] sm:$0xff]
      %778 = vrot.lane.b32.xlu0 %v774, 32
      %v779 = vpop.permute.xlu0 %778
      %v780 = vsel %vm462, %v779, 0
      %782 = vmatprep.subr.mxu0 0.0
      %783 = vmatpush1.msra.mxu0 %v564
      %784 = vmatprep.subr.mxu0 0.0
      %785 = vmatpush1.msra.mxu0 %v565
      %786 = vmatprep.subr.mxu0 0.0
      %787 = vmatpush1.msra.mxu0 %v566
      %788 = vmatprep.subr.mxu0 0.0
      %789 = vmatpush1.msra.mxu0 %v567
      %790 = vmatprep.subr.mxu0 0.0
      %791 = vmatpush1.msra.mxu0 0.0
      %792 = vmatprep.subr.mxu0 0.0
      %793 = vmatpush1.msra.mxu0 0.0
      %794 = vmatprep.subr.mxu0 0.0
      %795 = vmatpush1.msra.mxu0 0.0
      %796 = vmatprep.subr.mxu0 0.0
      %797 = vmatpush1.msra.mxu0 0.0
      %798 = vmatprep.subr.mxu0 0.0
      %799 = vmatpush1.msra.mxu0 0.0
      %800 = vmatprep.subr.mxu0 0.0
      %801 = vmatpush1.msra.mxu0 0.0
      %802 = vmatprep.subr.mxu0 0.0
      %803 = vmatpush1.msra.mxu0 0.0
      %804 = vmatprep.subr.mxu0 0.0
      %805 = vmatpush1.msra.mxu0 0.0
      %806 = vmatprep.subr.mxu0 0.0
      %807 = vmatpush1.msra.mxu0 0.0
      %808 = vmatprep.subr.mxu0 0.0
      %809 = vmatpush1.msra.mxu0 0.0
      %810 = vmatprep.subr.mxu0 0.0
      %811 = vmatpush1.msra.mxu0 0.0
      %812 = vmatprep.subr.mxu0 0.0
      %813 = vmatpush1.msra.mxu0 0.0
      %814 = vmatprep.subr.mxu0 0.0
      %815 = vmatpush1.msra.mxu0 0.0
      %816 = vmatprep.subr.mxu0 0.0
      %817 = vmatpush1.msra.mxu0 0.0
      %818 = vmatprep.subr.mxu0 0.0
      %819 = vmatpush1.msra.mxu0 0.0
      %820 = vmatprep.subr.mxu0 0.0
      %821 = vmatpush1.msra.mxu0 0.0
      %822 = vmatprep.subr.mxu0 0.0
      %823 = vmatpush1.msra.mxu0 0.0
      %824 = vmatprep.subr.mxu0 0.0
      %825 = vmatpush1.msra.mxu0 0.0
      %826 = vmatprep.subr.mxu0 0.0
      %827 = vmatpush1.msra.mxu0 0.0
      %828 = vmatprep.subr.mxu0 0.0
      %829 = vmatpush1.msra.mxu0 0.0
      %830 = vmatprep.subr.mxu0 0.0
      %831 = vmatpush1.msra.mxu0 0.0
      %832 = vmatprep.subr.mxu0 0.0
      %833 = vmatpush1.msra.mxu0 0.0
      %834 = vmatprep.subr.mxu0 0.0
      %835 = vmatpush1.msra.mxu0 0.0
      %836 = vmatprep.subr.mxu0 0.0
      %837 = vmatpush1.msra.mxu0 0.0
      %838 = vmatprep.subr.mxu0 0.0
      %839 = vmatpush1.msra.mxu0 0.0
      %840 = vmatprep.subr.mxu0 0.0
      %841 = vmatpush1.msra.mxu0 0.0
      %842 = vmatprep.subr.mxu0 0.0
      %843 = vmatpush1.msra.mxu0 0.0
      %844 = vmatprep.subr.mxu0 0.0
      %845 = vmatpush1.msra.mxu0 0.0
      %846 = vmatprep.mubr.f32.mxu0 0.0
      %847 = vmatmul.mubr.f32.gmra.mrb[0].mxu0 %v780
      %v848 = vpop.f32.mrb[0].mxu0
      %v849 = vadd.f32 0.0, %v848
      %v850 = vpop.f32.mrb[0].mxu0
      %851 = vdwg.mxu0
      %v852 = vadd.f32 %v776, %v849
      %v853 = vxor.u32 %v852, 2147483648
      %v854 = vmul.f32 %v853, 1.442695
      %v855 = vpow.pop %v854
      %v856 = vadd.f32 %v855, 1.0
      %v857 = vrcp.pop %v856
      %v858 = vmul.f32 1.0, %v857
      %v859 = vtanh.pop %v852
      %v860 = vmul.f32 %v858, %v768
      %862 = vrot.lane.b32.xlu0 %v859, 64
      %v863 = vpop.permute.xlu0 %862
      %v865 = vmul.f32 %v858, %v863
      %867 = vrot.lane.b32.xlu0 %v865, 32
      %v868 = vpop.permute.xlu0 %867
      %v870 = vadd.f32 %v860, %v868
      %v871 = vtanh.pop %v870
      %873 = vrot.lane.b32.xlu0 %v871, 64
      %v874 = vpop.permute.xlu0 %873
      %v876 = vmul.f32 %v858, %v874
      %s877 = scalar_lea.vmem [#allocation4], 24
      %v878 = vld [vmem:[%s877] sm:$0xff]
      %880 = vrot.lane.b32.xlu0 %v876, 32
      %v881 = vpop.permute.xlu0 %880
      %v882 = vsel %vm462, %v881, 0
      %884 = vmatprep.subr.mxu0 0.0
      %885 = vmatpush1.msra.mxu0 %v564
      %886 = vmatprep.subr.mxu0 0.0
      %887 = vmatpush1.msra.mxu0 %v565
      %888 = vmatprep.subr.mxu0 0.0
      %889 = vmatpush1.msra.mxu0 %v566
      %890 = vmatprep.subr.mxu0 0.0
      %891 = vmatpush1.msra.mxu0 %v567
      %892 = vmatprep.subr.mxu0 0.0
      %893 = vmatpush1.msra.mxu0 0.0
      %894 = vmatprep.subr.mxu0 0.0
      %895 = vmatpush1.msra.mxu0 0.0
      %896 = vmatprep.subr.mxu0 0.0
      %897 = vmatpush1.msra.mxu0 0.0
      %898 = vmatprep.subr.mxu0 0.0
      %899 = vmatpush1.msra.mxu0 0.0
      %900 = vmatprep.subr.mxu0 0.0
      %901 = vmatpush1.msra.mxu0 0.0
      %902 = vmatprep.subr.mxu0 0.0
      %903 = vmatpush1.msra.mxu0 0.0
      %904 = vmatprep.subr.mxu0 0.0
      %905 = vmatpush1.msra.mxu0 0.0
      %906 = vmatprep.subr.mxu0 0.0
      %907 = vmatpush1.msra.mxu0 0.0
      %908 = vmatprep.subr.mxu0 0.0
      %909 = vmatpush1.msra.mxu0 0.0
      %910 = vmatprep.subr.mxu0 0.0
      %911 = vmatpush1.msra.mxu0 0.0
      %912 = vmatprep.subr.mxu0 0.0
      %913 = vmatpush1.msra.mxu0 0.0
      %914 = vmatprep.subr.mxu0 0.0
      %915 = vmatpush1.msra.mxu0 0.0
      %916 = vmatprep.subr.mxu0 0.0
      %917 = vmatpush1.msra.mxu0 0.0
      %918 = vmatprep.subr.mxu0 0.0
      %919 = vmatpush1.msra.mxu0 0.0
      %920 = vmatprep.subr.mxu0 0.0
      %921 = vmatpush1.msra.mxu0 0.0
      %922 = vmatprep.subr.mxu0 0.0
      %923 = vmatpush1.msra.mxu0 0.0
      %924 = vmatprep.subr.mxu0 0.0
      %925 = vmatpush1.msra.mxu0 0.0
      %926 = vmatprep.subr.mxu0 0.0
      %927 = vmatpush1.msra.mxu0 0.0
      %928 = vmatprep.subr.mxu0 0.0
      %929 = vmatpush1.msra.mxu0 0.0
      %930 = vmatprep.subr.mxu0 0.0
      %931 = vmatpush1.msra.mxu0 0.0
      %932 = vmatprep.subr.mxu0 0.0
      %933 = vmatpush1.msra.mxu0 0.0
      %934 = vmatprep.subr.mxu0 0.0
      %935 = vmatpush1.msra.mxu0 0.0
      %936 = vmatprep.subr.mxu0 0.0
      %937 = vmatpush1.msra.mxu0 0.0
      %938 = vmatprep.subr.mxu0 0.0
      %939 = vmatpush1.msra.mxu0 0.0
      %940 = vmatprep.subr.mxu0 0.0
      %941 = vmatpush1.msra.mxu0 0.0
      %942 = vmatprep.subr.mxu0 0.0
      %943 = vmatpush1.msra.mxu0 0.0
      %944 = vmatprep.subr.mxu0 0.0
      %945 = vmatpush1.msra.mxu0 0.0
      %946 = vmatprep.subr.mxu0 0.0
      %947 = vmatpush1.msra.mxu0 0.0
      %948 = vmatprep.mubr.f32.mxu0 0.0
      %949 = vmatmul.mubr.f32.gmra.mrb[0].mxu0 %v882
      %v950 = vpop.f32.mrb[0].mxu0
      %v951 = vadd.f32 0.0, %v950
      %v952 = vpop.f32.mrb[0].mxu0
      %953 = vdwg.mxu0
      %v954 = vadd.f32 %v878, %v951
      %v955 = vxor.u32 %v954, 2147483648
      %v956 = vmul.f32 %v955, 1.442695
      %v957 = vpow.pop %v956
      %v958 = vadd.f32 %v957, 1.0
      %v959 = vrcp.pop %v958
      %v960 = vmul.f32 1.0, %v959
      %v961 = vtanh.pop %v954
      %v962 = vmul.f32 %v960, %v870
      %964 = vrot.lane.b32.xlu0 %v961, 64
      %v965 = vpop.permute.xlu0 %964
      %v967 = vmul.f32 %v960, %v965
      %969 = vrot.lane.b32.xlu0 %v967, 32
      %v970 = vpop.permute.xlu0 %969
      %v972 = vadd.f32 %v962, %v970
      %v973 = vtanh.pop %v972
      %975 = vrot.lane.b32.xlu0 %v973, 64
      %v976 = vpop.permute.xlu0 %975
      %v978 = vmul.f32 %v960, %v976
      %980 = vrot.lane.b32.xlu0 %v978, 32
      %v981 = vpop.permute.xlu0 %980
      %983 = vst.msk [vmem:[#allocation2] sm:$0xff] %vm462, %v981
      %985 = vrot.lane.b32.xlu0 %v972, 96
      %v986 = vpop.permute.xlu0 %985
      %988 = vst.msk [vmem:[#allocation3] sm:$0xff] %vm462, %v986
      %p989 = scmp.eq.s32.totalorder %s27, 1
      // Predicated region
      $region57: #{sentiment_rnn_forward.3} parent=51 // pred_check
        %p990 = pneg %p989
      $region58: #{sentiment_rnn_forward.3} parent=51 // pred_check_branch
        %992 = sbr.rel (%p990) target = $region60
      $region59: #{sentiment_rnn_forward.3} parent=51 // pred_region
        %993 = vst.msk [vmem:[%s433] sm:$0xff] %vm462, %v981
        %994 = vst.msk [vmem:[%s437] sm:$0xff] %vm462, %v986
        %v995 = vld [vmem:[%s6] sm:$0xff]
        %v996 = vld [vmem:[%s6 + $0x8] sm:$0xff]
        %v997 = vld [vmem:[%s6 + $0x10] sm:$0xff]
        %v998 = vld [vmem:[%s6 + $0x18] sm:$0xff]
        %v999 = vld [vmem:[%s7] sm:$0x1]
        %v1001 = vlaneseq
        %v1002 = vshrl.u32 %v1001, 7
        %v1003 = vsub.s32 0, %v1002
        %v1004 = vrot.slane %v999, %v1003
        %v1006 = vsel %vm462, %v981, 0
        %1008 = vmatprep.subr.mxu0 0.0
        %1009 = vmatpush1.msra.mxu0 %v995
        %1010 = vmatprep.subr.mxu0 0.0
        %1011 = vmatpush1.msra.mxu0 %v996
        %1012 = vmatprep.subr.mxu0 0.0
        %1013 = vmatpush1.msra.mxu0 %v997
        %1014 = vmatprep.subr.mxu0 0.0
        %1015 = vmatpush1.msra.mxu0 %v998
        %1016 = vmatprep.subr.mxu0 0.0
        %1017 = vmatpush1.msra.mxu0 0.0
        %1018 = vmatprep.subr.mxu0 0.0
        %1019 = vmatpush1.msra.mxu0 0.0
        %1020 = vmatprep.subr.mxu0 0.0
        %1021 = vmatpush1.msra.mxu0 0.0
        %1022 = vmatprep.subr.mxu0 0.0
        %1023 = vmatpush1.msra.mxu0 0.0
        %1024 = vmatprep.subr.mxu0 0.0
        %1025 = vmatpush1.msra.mxu0 0.0
        %1026 = vmatprep.subr.mxu0 0.0
        %1027 = vmatpush1.msra.mxu0 0.0
        %1028 = vmatprep.subr.mxu0 0.0
        %1029 = vmatpush1.msra.mxu0 0.0
        %1030 = vmatprep.subr.mxu0 0.0
        %1031 = vmatpush1.msra.mxu0 0.0
        %1032 = vmatprep.subr.mxu0 0.0
        %1033 = vmatpush1.msra.mxu0 0.0
        %1034 = vmatprep.subr.mxu0 0.0
        %1035 = vmatpush1.msra.mxu0 0.0
        %1036 = vmatprep.subr.mxu0 0.0
        %1037 = vmatpush1.msra.mxu0 0.0
        %1038 = vmatprep.subr.mxu0 0.0
        %1039 = vmatpush1.msra.mxu0 0.0
        %1040 = vmatprep.subr.mxu0 0.0
        %1041 = vmatpush1.msra.mxu0 0.0
        %1042 = vmatprep.subr.mxu0 0.0
        %1043 = vmatpush1.msra.mxu0 0.0
        %1044 = vmatprep.subr.mxu0 0.0
        %1045 = vmatpush1.msra.mxu0 0.0
        %1046 = vmatprep.subr.mxu0 0.0
        %1047 = vmatpush1.msra.mxu0 0.0
        %1048 = vmatprep.subr.mxu0 0.0
        %1049 = vmatpush1.msra.mxu0 0.0
        %1050 = vmatprep.subr.mxu0 0.0
        %1051 = vmatpush1.msra.mxu0 0.0
        %1052 = vmatprep.subr.mxu0 0.0
        %1053 = vmatpush1.msra.mxu0 0.0
        %1054 = vmatprep.subr.mxu0 0.0
        %1055 = vmatpush1.msra.mxu0 0.0
        %1056 = vmatprep.subr.mxu0 0.0
        %1057 = vmatpush1.msra.mxu0 0.0
        %1058 = vmatprep.subr.mxu0 0.0
        %1059 = vmatpush1.msra.mxu0 0.0
        %1060 = vmatprep.subr.mxu0 0.0
        %1061 = vmatpush1.msra.mxu0 0.0
        %1062 = vmatprep.subr.mxu0 0.0
        %1063 = vmatpush1.msra.mxu0 0.0
        %1064 = vmatprep.subr.mxu0 0.0
        %1065 = vmatpush1.msra.mxu0 0.0
        %1066 = vmatprep.subr.mxu0 0.0
        %1067 = vmatpush1.msra.mxu0 0.0
        %1068 = vmatprep.subr.mxu0 0.0
        %1069 = vmatpush1.msra.mxu0 0.0
        %1070 = vmatprep.subr.mxu0 0.0
        %1071 = vmatpush1.msra.mxu0 0.0
        %1072 = vmatprep.mubr.f32.mxu0 0.0
        %1073 = vmatmul.mubr.f32.gmra.mrb[0].mxu0 %v1006
        %v1074 = vpop.f32.mrb[0].mxu0
        %v1075 = vadd.f32 %v1004, %v1074
        %v1076 = vpop.f32.mrb[0].mxu0
        %1077 = vdwg.mxu0
        %vm1078 = vcmask 15360
        %v1079 = vsel %vm1078, %v1075, -inf
        %1080 = vmax.xlane.f32.xlu0 %v1079
        %v1081 = vpop.xlane.xlu0 %1080
        %v1082 = vsub.f32 %v1075, %v1081
        %v1083 = vmul.f32 %v1082, 1.442695
        %v1084 = vpow.pop %v1083
        %v1085 = vsel %vm1078, %v1084, 0.0
        %1086 = vadd.xlane.f32.xlu0 %v1085
        %v1087 = vpop.xlane.xlu0 %1086
        %v1088 = vrcp.pop %v1087
        %v1089 = vmul.f32 %v1084, %v1088
        %1090 = vst.msk [vmem:[%s429] sm:$0xff] %vm1078, %v1089
      $region60: #{sentiment_rnn_forward.3} parent=51 // pred_fallthru
        _
      %p1091 = scmp.lt.s32.totalorder %s26, 0
      %s1092 = scalar_select %p1091, %s26, 0
      %s1093 = smul.addr %s1092, 8
      %s1094 = scalar_lea.vmem %s8, %s1093
      %p1095 = scmp.lt.s32.totalorder %s26, 0
      %s1096 = scalar_select %p1095, %s26, 0
      %s1097 = smul.addr %s1096, 8
      %s1098 = scalar_lea.vmem %s9, %s1097
      %p1099 = scmp.lt.s32.totalorder %s26, 0
      %s1100 = scalar_select %p1099, %s26, 0
      %s1101 = smul.addr %s1100, 8
      %s1102 = scalar_lea.vmem %s10, %s1101
      // Predicated region
      $region61: #{sentiment_rnn_forward.3} parent=51 // pred_check
        %p1103 = pneg %p237
      $region62: #{sentiment_rnn_forward.3} parent=51 // pred_check_branch
        %1105 = sbr.rel (%p1103) target = $region64
      $region63: #{sentiment_rnn_forward.3} parent=51 // pred_region
        _
      $region64: #{sentiment_rnn_forward.3} parent=51 // pred_fallthru
        _
      // Predicated region
      $region65: #{sentiment_rnn_forward.3} parent=51 // pred_check
        %p1106 = pneg %p263
      $region66: #{sentiment_rnn_forward.3} parent=51 // pred_check_branch
        %1108 = sbr.rel (%p1106) target = $region68
      $region67: #{sentiment_rnn_forward.3} parent=51 // pred_region
        _
      $region68: #{sentiment_rnn_forward.3} parent=51 // pred_fallthru
        _
      // Predicated region
      $region69: #{sentiment_rnn_forward.3} parent=51 // pred_check
        %p1109 = pneg %p289
      $region70: #{sentiment_rnn_forward.3} parent=51 // pred_check_branch
        %1111 = sbr.rel (%p1109) target = $region72
      $region71: #{sentiment_rnn_forward.3} parent=51 // pred_region
        _
      $region72: #{sentiment_rnn_forward.3} parent=51 // pred_fallthru
        _
      // Predicated region
      $region73: #{sentiment_rnn_forward.3} parent=51 // pred_check
        %p1112 = pneg %p237
      $region74: #{sentiment_rnn_forward.3} parent=51 // pred_check_branch
        %1114 = sbr.rel (%p1112) target = $region76
      $region75: #{sentiment_rnn_forward.3} parent=51 // pred_region
        %p1115 = scmp.lt.s32.totalorder %s26, 0
        %s1116 = scalar_select %p1115, %s26, 0
        %s1117 = smul.addr %s1116, 8
        %s1118 = scalar_lea.vmem %s8, %s1117
      $region76: #{sentiment_rnn_forward.3} parent=51 // pred_fallthru
        _
      // Predicated region
      $region77: #{sentiment_rnn_forward.3} parent=51 // pred_check
        %p1119 = pneg %p263
      $region78: #{sentiment_rnn_forward.3} parent=51 // pred_check_branch
        %1121 = sbr.rel (%p1119) target = $region80
      $region79: #{sentiment_rnn_forward.3} parent=51 // pred_region
        %p1122 = scmp.lt.s32.totalorder %s26, 0
        %s1123 = scalar_select %p1122, %s26, 0
        %s1124 = smul.addr %s1123, 8
        %s1125 = scalar_lea.vmem %s9, %s1124
      $region80: #{sentiment_rnn_forward.3} parent=51 // pred_fallthru
        _
      // Predicated region
      $region81: #{sentiment_rnn_forward.3} parent=51 // pred_check
        %p1126 = pneg %p289
      $region82: #{sentiment_rnn_forward.3} parent=51 // pred_check_branch
        %1128 = sbr.rel (%p1126) target = $region84
      $region83: #{sentiment_rnn_forward.3} parent=51 // pred_region
        %p1129 = scmp.lt.s32.totalorder %s26, 0
        %s1130 = scalar_select %p1129, %s26, 0
        %s1131 = smul.addr %s1130, 8
        %s1132 = scalar_lea.vmem %s10, %s1131
      $region84: #{sentiment_rnn_forward.3} parent=51 // pred_fallthru
        _
    $region52: #{sentiment_rnn_forward.3} parent=5 // pred_fallthru
      _
    %p1133 = scmp.le.s32.totalorder 2, %s17
    // Predicated region
    $region85: #{sentiment_rnn_forward.3} parent=5 // pred_check
      %p1134 = pneg %p1133
    $region86: #{sentiment_rnn_forward.3} parent=5 // pred_check_branch
      %1136 = sbr.rel (%p1134) target = $region88
    $region87: #{sentiment_rnn_forward.3} parent=5 // pred_region
      %s1137 = ssub.s32 %s17, 2
    $region88: #{sentiment_rnn_forward.3} parent=5 // pred_fallthru
      _
  $region6: #{sentiment_rnn_forward.3} parent=0 // loop_footer
    %s21 = sadd.s32 1, %s17
  $region7: #{sentiment_rnn_forward.3} parent=0 // loop_footer_branch
    %16 = sbr.rel target = $region3
  $region8: #{sentiment_rnn_forward.3} parent=0 // loop_exit
    _

// kernel: sentiment_rnn_forward.2
$region0: #{sentiment_rnn_forward.2}
  #allocation0 [shape = 'u32[]', space=smem, size = 0x4, offset = 0x4, fixed_abs, tag = 'smem constant byte address 0x4 - core index']
  #allocation1 [shape = 'u32[144,128]{1,0:T(1,128)}', space=vmem, size = 0x12000, scoped, tag = 'internal scratch']
  #allocation2 [shape = 'f32[8,32]{1,0:T(8,128)}', space=vmem, size = 0x1000, scoped, tag = 'scratch operand']
  #allocation3 [shape = 'f32[8,32]{1,0:T(8,128)}', space=vmem, size = 0x1000, scoped, tag = 'scratch operand']
  #allocation4 [shape = 'f32[4,8,128]{2,1,0:T(8,128)}', space=vmem, size = 0x4000, scoped, tag = 'scratch operand']
  %s0 = inlined_call_operand.vmem [shape: f32[8,8,32], index: 0, kind: input, shape index: {}]
  %s1 = inlined_call_operand.vmem [shape: f32[32,128], index: 1, kind: input, shape index: {}]
  %s2 = inlined_call_operand.vmem [shape: f32[32,128], index: 2, kind: input, shape index: {}]
  %s3 = inlined_call_operand.vmem [shape: f32[1,128], index: 3, kind: input, shape index: {}]
  %s4 = inlined_call_operand.vmem [shape: f32[8,32], index: 4, kind: input, shape index: {}]
  %s5 = inlined_call_operand.vmem [shape: f32[8,32], index: 5, kind: input, shape index: {}]
  %s6 = inlined_call_operand.vmem [shape: f32[8,8,32], index: 6, kind: output, shape index: {0}]
  %s7 = inlined_call_operand.vmem [shape: f32[8,32], index: 7, kind: output, shape index: {1}]
  %s8 = inlined_call_operand.vmem [shape: f32[8,32], index: 8, kind: output, shape index: {2}]
  %9 = xla_tuple %s6, %s7, %s8
  %s10 = sld [smem:[#allocation0]]
  $region81: #{sentiment_rnn_forward.2} parent=0
    _
  %s12 = ssub.s32 1, %s10
  %s13 = scalar_select 0, %s12, %s10
  loop: start=0, step=1, limit=4
  $region2: #{sentiment_rnn_forward.2} parent=0 // loop_pre_header
    _
  $region3: #{sentiment_rnn_forward.2} parent=0 // loop_header
    %s15 = sphi 0, %s19
    %p16 = scmp.ge.s32.totalorder %s15, 4
    %s22 = sphi 0, %s34
    %s23 = sphi 0, %s30
    %s24 = sphi 0, %s22
    %s25 = sphi 0, %s23
    %s26 = sphi 0, %s24
    %s27 = sphi 0, %s25
    %s39 = sphi 0, %s41
    %s42 = sphi 0, %s39
    %s43 = sphi 0, %s42
    %s59 = sphi 0, %s43
    %s63 = sphi 0, %s63
    %s65 = sphi 0, %s63
    %s66 = sphi 0, %s65
    %s80 = sphi 0, %s66
    %s84 = sphi 0, %s84
    %s86 = sphi 0, %s84
    %s87 = sphi 0, %s86
    %s101 = sphi 0, %s87
    %s105 = sphi 0, %s105
    %s107 = sphi 0, %s105
    %s108 = sphi 0, %s107
    %s122 = sphi 0, %s108
    %s128 = sphi 0, %s130
    %s131 = sphi 0, %s128
    %s132 = sphi 0, %s131
    %s148 = sphi 0, %s132
    %s154 = sphi 0, %s156
    %s157 = sphi 0, %s154
    %s158 = sphi 0, %s157
    %s174 = sphi 0, %s158
    %s182 = sphi 0, %s184
    %s185 = sphi 0, %s182
    %s186 = sphi 0, %s185
    %s202 = sphi 0, %s186
    %s208 = sphi 0, %s210
    %s211 = sphi 0, %s208
    %s212 = sphi 0, %s211
    %s228 = sphi 0, %s212
    %s234 = sphi 0, %s236
    %s237 = sphi 0, %s234
    %s238 = sphi 0, %s237
    %s254 = sphi 0, %s238
  $region4: #{sentiment_rnn_forward.2} parent=0 // loop_header_branch
    %18 = sbr.rel (%p16) target = $region8
  $region5: #{sentiment_rnn_forward.2} parent=0 // loop_body
    %s20 = ssub.s32 %s15, 1
    %s21 = ssub.s32 %s15, 2
    %s28 = sadd.s32 1, %s23
    %p29 = scmp.ge.s32.totalorder %s28, 2
    %s30 = scalar_select %p29, 0, %s28
    %s31 = sadd.s32 1, %s22
    %s32 = scalar_select %p29, %s31, %s22
    %p33 = scmp.ge.s32.totalorder %s32, 1
    %s34 = scalar_select %p33, 0, %s32
    %s35 = ssub.s32 %s23, %s30
    %s36 = ssub.s32 %s22, %s34
    %s37 = sor.u32 %s35, %s36
    %p38 = scmp.eq.s32.totalorder %s37, 0
    %s40 = sadd.s32 %s39, 1
    %s41 = scalar_select %p38, %s39, %s40
    %p44 = pneg %p38
    %p45 = scmp.eq.s32.totalorder %s15, 1
    %p46 = por %p44, %p45
    %p47 = scmp.ne.s32.totalorder %s39, %s42
    %p48 = scmp.eq.s32.totalorder %s15, 0
    %p49 = por %p47, %p48
    %p50 = scmp.ne.s32.totalorder %s39, %s42
    %p51 = scmp.eq.s32.totalorder %s20, 1
    %p52 = por %p50, %p51
    %p53 = scmp.ne.s32.totalorder %s42, %s43
    %p54 = scmp.eq.s32.totalorder %s20, 0
    %p55 = por %p53, %p54
    %p56 = scmp.ne.s32.totalorder %s42, %s43
    %p57 = scmp.eq.s32.totalorder %s21, 1
    %p58 = por %p56, %p57
    %p60 = scmp.ne.s32.totalorder %s43, %s59
    %p61 = scmp.eq.s32.totalorder %s21, 0
    %p62 = por %p60, %p61
    %s64 = sadd.s32 %s63, 1
    %p67 = scmp.eq.s32.totalorder %s15, 1
    %p68 = scmp.ne.s32.totalorder %s63, %s65
    %p69 = scmp.eq.s32.totalorder %s15, 0
    %p70 = por %p68, %p69
    %p71 = scmp.ne.s32.totalorder %s63, %s65
    %p72 = scmp.eq.s32.totalorder %s20, 1
    %p73 = por %p71, %p72
    %p74 = scmp.ne.s32.totalorder %s65, %s66
    %p75 = scmp.eq.s32.totalorder %s20, 0
    %p76 = por %p74, %p75
    %p77 = scmp.ne.s32.totalorder %s65, %s66
    %p78 = scmp.eq.s32.totalorder %s21, 1
    %p79 = por %p77, %p78
    %p81 = scmp.ne.s32.totalorder %s66, %s80
    %p82 = scmp.eq.s32.totalorder %s21, 0
    %p83 = por %p81, %p82
    %s85 = sadd.s32 %s84, 1
    %p88 = scmp.eq.s32.totalorder %s15, 1
    %p89 = scmp.ne.s32.totalorder %s84, %s86
    %p90 = scmp.eq.s32.totalorder %s15, 0
    %p91 = por %p89, %p90
    %p92 = scmp.ne.s32.totalorder %s84, %s86
    %p93 = scmp.eq.s32.totalorder %s20, 1
    %p94 = por %p92, %p93
    %p95 = scmp.ne.s32.totalorder %s86, %s87
    %p96 = scmp.eq.s32.totalorder %s20, 0
    %p97 = por %p95, %p96
    %p98 = scmp.ne.s32.totalorder %s86, %s87
    %p99 = scmp.eq.s32.totalorder %s21, 1
    %p100 = por %p98, %p99
    %p102 = scmp.ne.s32.totalorder %s87, %s101
    %p103 = scmp.eq.s32.totalorder %s21, 0
    %p104 = por %p102, %p103
    %s106 = sadd.s32 %s105, 1
    %p109 = scmp.eq.s32.totalorder %s15, 1
    %p110 = scmp.ne.s32.totalorder %s105, %s107
    %p111 = scmp.eq.s32.totalorder %s15, 0
    %p112 = por %p110, %p111
    %p113 = scmp.ne.s32.totalorder %s105, %s107
    %p114 = scmp.eq.s32.totalorder %s20, 1
    %p115 = por %p113, %p114
    %p116 = scmp.ne.s32.totalorder %s107, %s108
    %p117 = scmp.eq.s32.totalorder %s20, 0
    %p118 = por %p116, %p117
    %p119 = scmp.ne.s32.totalorder %s107, %s108
    %p120 = scmp.eq.s32.totalorder %s21, 1
    %p121 = por %p119, %p120
    %p123 = scmp.ne.s32.totalorder %s108, %s122
    %p124 = scmp.eq.s32.totalorder %s21, 0
    %p125 = por %p123, %p124
    %s126 = ssub.s32 %s22, %s34
    %p127 = scmp.eq.s32.totalorder %s126, 0
    %s129 = sadd.s32 %s128, 1
    %s130 = scalar_select %p127, %s128, %s129
    %p133 = pneg %p127
    %p134 = scmp.eq.s32.totalorder %s15, 1
    %p135 = por %p133, %p134
    %p136 = scmp.ne.s32.totalorder %s128, %s131
    %p137 = scmp.eq.s32.totalorder %s15, 0
    %p138 = por %p136, %p137
    %p139 = scmp.ne.s32.totalorder %s128, %s131
    %p140 = scmp.eq.s32.totalorder %s20, 1
    %p141 = por %p139, %p140
    %p142 = scmp.ne.s32.totalorder %s131, %s132
    %p143 = scmp.eq.s32.totalorder %s20, 0
    %p144 = por %p142, %p143
    %p145 = scmp.ne.s32.totalorder %s131, %s132
    %p146 = scmp.eq.s32.totalorder %s21, 1
    %p147 = por %p145, %p146
    %p149 = scmp.ne.s32.totalorder %s132, %s148
    %p150 = scmp.eq.s32.totalorder %s21, 0
    %p151 = por %p149, %p150
    %s152 = ssub.s32 %s22, %s34
    %p153 = scmp.eq.s32.totalorder %s152, 0
    %s155 = sadd.s32 %s154, 1
    %s156 = scalar_select %p153, %s154, %s155
    %p159 = pneg %p153
    %p160 = scmp.eq.s32.totalorder %s15, 1
    %p161 = por %p159, %p160
    %p162 = scmp.ne.s32.totalorder %s154, %s157
    %p163 = scmp.eq.s32.totalorder %s15, 0
    %p164 = por %p162, %p163
    %p165 = scmp.ne.s32.totalorder %s154, %s157
    %p166 = scmp.eq.s32.totalorder %s20, 1
    %p167 = por %p165, %p166
    %p168 = scmp.ne.s32.totalorder %s157, %s158
    %p169 = scmp.eq.s32.totalorder %s20, 0
    %p170 = por %p168, %p169
    %p171 = scmp.ne.s32.totalorder %s157, %s158
    %p172 = scmp.eq.s32.totalorder %s21, 1
    %p173 = por %p171, %p172
    %p175 = scmp.ne.s32.totalorder %s158, %s174
    %p176 = scmp.eq.s32.totalorder %s21, 0
    %p177 = por %p175, %p176
    %s178 = ssub.s32 %s23, %s30
    %s179 = ssub.s32 %s22, %s34
    %s180 = sor.u32 %s178, %s179
    %p181 = scmp.eq.s32.totalorder %s180, 0
    %s183 = sadd.s32 %s182, 1
    %s184 = scalar_select %p181, %s182, %s183
    %p187 = pneg %p181
    %p188 = scmp.eq.s32.totalorder %s15, 1
    %p189 = por %p187, %p188
    %p190 = scmp.ne.s32.totalorder %s182, %s185
    %p191 = scmp.eq.s32.totalorder %s15, 0
    %p192 = por %p190, %p191
    %p193 = scmp.ne.s32.totalorder %s182, %s185
    %p194 = scmp.eq.s32.totalorder %s20, 1
    %p195 = por %p193, %p194
    %p196 = scmp.ne.s32.totalorder %s185, %s186
    %p197 = scmp.eq.s32.totalorder %s20, 0
    %p198 = por %p196, %p197
    %p199 = scmp.ne.s32.totalorder %s185, %s186
    %p200 = scmp.eq.s32.totalorder %s21, 1
    %p201 = por %p199, %p200
    %p203 = scmp.ne.s32.totalorder %s186, %s202
    %p204 = scmp.eq.s32.totalorder %s21, 0
    %p205 = por %p203, %p204
    %s206 = ssub.s32 %s22, %s34
    %p207 = scmp.eq.s32.totalorder %s206, 0
    %s209 = sadd.s32 %s208, 1
    %s210 = scalar_select %p207, %s208, %s209
    %p213 = pneg %p207
    %p214 = scmp.eq.s32.totalorder %s15, 1
    %p215 = por %p213, %p214
    %p216 = scmp.ne.s32.totalorder %s208, %s211
    %p217 = scmp.eq.s32.totalorder %s15, 0
    %p218 = por %p216, %p217
    %p219 = scmp.ne.s32.totalorder %s208, %s211
    %p220 = scmp.eq.s32.totalorder %s20, 1
    %p221 = por %p219, %p220
    %p222 = scmp.ne.s32.totalorder %s211, %s212
    %p223 = scmp.eq.s32.totalorder %s20, 0
    %p224 = por %p222, %p223
    %p225 = scmp.ne.s32.totalorder %s211, %s212
    %p226 = scmp.eq.s32.totalorder %s21, 1
    %p227 = por %p225, %p226
    %p229 = scmp.ne.s32.totalorder %s212, %s228
    %p230 = scmp.eq.s32.totalorder %s21, 0
    %p231 = por %p229, %p230
    %s232 = ssub.s32 %s22, %s34
    %p233 = scmp.eq.s32.totalorder %s232, 0
    %s235 = sadd.s32 %s234, 1
    %s236 = scalar_select %p233, %s234, %s235
    %p239 = pneg %p233
    %p240 = scmp.eq.s32.totalorder %s15, 1
    %p241 = por %p239, %p240
    %p242 = scmp.ne.s32.totalorder %s234, %s237
    %p243 = scmp.eq.s32.totalorder %s15, 0
    %p244 = por %p242, %p243
    %p245 = scmp.ne.s32.totalorder %s234, %s237
    %p246 = scmp.eq.s32.totalorder %s20, 1
    %p247 = por %p245, %p246
    %p248 = scmp.ne.s32.totalorder %s237, %s238
    %p249 = scmp.eq.s32.totalorder %s20, 0
    %p250 = por %p248, %p249
    %p251 = scmp.ne.s32.totalorder %s237, %s238
    %p252 = scmp.eq.s32.totalorder %s21, 1
    %p253 = por %p251, %p252
    %p255 = scmp.ne.s32.totalorder %s238, %s254
    %p256 = scmp.eq.s32.totalorder %s21, 0
    %p257 = por %p255, %p256
    %p258 = scmp.le.s32.totalorder 1, %s15
    %p259 = scmp.lt.s32.totalorder %s15, 3
    %p260 = pnand %p258, %p259
    %p261 = pneg %p260
    // Predicated region
    $region9: #{sentiment_rnn_forward.2} parent=5 // pred_check
      _
    $region10: #{sentiment_rnn_forward.2} parent=5 // pred_check_branch
      %263 = sbr.rel (%p260) target = $region12
    $region11: #{sentiment_rnn_forward.2} parent=5 // pred_region
      %s264 = ssub.s32 %s15, 1
      // Predicated region
      $region13: #{sentiment_rnn_forward.2} parent=11 // pred_check
        %p265 = pneg %p76
      $region14: #{sentiment_rnn_forward.2} parent=11 // pred_check_branch
        %267 = sbr.rel (%p265) target = $region16
      $region15: #{sentiment_rnn_forward.2} parent=11 // pred_region
        _
      $region16: #{sentiment_rnn_forward.2} parent=11 // pred_fallthru
        _
      // Predicated region
      $region17: #{sentiment_rnn_forward.2} parent=11 // pred_check
        %p268 = pneg %p97
      $region18: #{sentiment_rnn_forward.2} parent=11 // pred_check_branch
        %270 = sbr.rel (%p268) target = $region20
      $region19: #{sentiment_rnn_forward.2} parent=11 // pred_region
        _
      $region20: #{sentiment_rnn_forward.2} parent=11 // pred_fallthru
        _
      // Predicated region
      $region21: #{sentiment_rnn_forward.2} parent=11 // pred_check
        %p271 = pneg %p118
      $region22: #{sentiment_rnn_forward.2} parent=11 // pred_check_branch
        %273 = sbr.rel (%p271) target = $region24
      $region23: #{sentiment_rnn_forward.2} parent=11 // pred_region
        _
      $region24: #{sentiment_rnn_forward.2} parent=11 // pred_fallthru
        _
      // Predicated region
      $region25: #{sentiment_rnn_forward.2} parent=11 // pred_check
        %p274 = pneg %p144
      $region26: #{sentiment_rnn_forward.2} parent=11 // pred_check_branch
        %276 = sbr.rel (%p274) target = $region28
      $region27: #{sentiment_rnn_forward.2} parent=11 // pred_region
        %p277 = scmp.lt.s32.totalorder %s24, 0
        %s278 = scalar_select %p277, %s24, 0
        %s279 = smul.addr %s278, 8
        %s280 = scalar_lea.vmem %s4, %s279
      $region28: #{sentiment_rnn_forward.2} parent=11 // pred_fallthru
        _
      // Predicated region
      $region29: #{sentiment_rnn_forward.2} parent=11 // pred_check
        %p281 = pneg %p170
      $region30: #{sentiment_rnn_forward.2} parent=11 // pred_check_branch
        %283 = sbr.rel (%p281) target = $region32
      $region31: #{sentiment_rnn_forward.2} parent=11 // pred_region
        %p284 = scmp.lt.s32.totalorder %s24, 0
        %s285 = scalar_select %p284, %s24, 0
        %s286 = smul.addr %s285, 8
        %s287 = scalar_lea.vmem %s5, %s286
      $region32: #{sentiment_rnn_forward.2} parent=11 // pred_fallthru
        _
    $region12: #{sentiment_rnn_forward.2} parent=5 // pred_fallthru
      _
    %p288 = scmp.lt.s32.totalorder %s15, 2
    // Predicated region
    $region33: #{sentiment_rnn_forward.2} parent=5 // pred_check
      %p289 = pneg %p288
    $region34: #{sentiment_rnn_forward.2} parent=5 // pred_check_branch
      %291 = sbr.rel (%p289) target = $region36
    $region35: #{sentiment_rnn_forward.2} parent=5 // pred_region
      // Predicated region
      $region37: #{sentiment_rnn_forward.2} parent=35 // pred_check
        %p292 = pneg %p49
      $region38: #{sentiment_rnn_forward.2} parent=35 // pred_check_branch
        %294 = sbr.rel (%p292) target = $region40
      $region39: #{sentiment_rnn_forward.2} parent=35 // pred_region
        %s295 = smul.u32 4, %s23
        %p296 = scmp.lt.s32.totalorder %s295, 7
        %s297 = scalar_select %p296, %s295, 7
        %p298 = scmp.lt.s32.totalorder %s22, 0
        %s299 = scalar_select %p298, %s22, 0
        %s300 = sadd.s32 %s299, %s297
        %s301 = smul.addr %s300, 8
        %s302 = scalar_lea.vmem %s0, %s301
        %s303 = smul.u32 4, %s23
      $region40: #{sentiment_rnn_forward.2} parent=35 // pred_fallthru
        _
    $region36: #{sentiment_rnn_forward.2} parent=5 // pred_fallthru
      _
    %p304 = scmp.le.s32.totalorder 1, %s15
    %p305 = scmp.lt.s32.totalorder %s15, 3
    %p306 = pnand %p304, %p305
    %p307 = pneg %p306
    // Predicated region
    $region41: #{sentiment_rnn_forward.2} parent=5 // pred_check
      _
    $region42: #{sentiment_rnn_forward.2} parent=5 // pred_check_branch
      %309 = sbr.rel (%p306) target = $region44
    $region43: #{sentiment_rnn_forward.2} parent=5 // pred_region
      %s310 = ssub.s32 %s15, 1
      %s311 = smul.u32 4, %s25
      %p312 = scmp.lt.s32.totalorder %s311, 7
      %s313 = scalar_select %p312, %s311, 7
      %p314 = scmp.lt.s32.totalorder %s24, 0
      %s315 = scalar_select %p314, %s24, 0
      %s316 = sadd.s32 %s315, %s313
      %s317 = smul.addr %s316, 8
      %s318 = scalar_lea.vmem %s0, %s317
      %p319 = pneg %p55
      %p320 = pneg %p52
      %p321 = pneg %p76
      %p322 = pneg %p73
      %p323 = pneg %p97
      %p324 = pneg %p94
      %p325 = pneg %p118
      %p326 = pneg %p115
      %p327 = scmp.lt.s32.totalorder %s24, 0
      %s328 = scalar_select %p327, %s24, 0
      %s329 = smul.addr %s328, 8
      %s330 = scalar_lea.vmem %s4, %s329
      %p331 = pneg %p144
      %p332 = pneg %p141
      %p333 = scmp.lt.s32.totalorder %s24, 0
      %s334 = scalar_select %p333, %s24, 0
      %s335 = smul.addr %s334, 8
      %s336 = scalar_lea.vmem %s5, %s335
      %p337 = pneg %p170
      %p338 = pneg %p167
      %p339 = pneg %p198
      %p340 = pneg %p195
      %s341 = smul.u32 4, %s25
      %p342 = scmp.lt.s32.totalorder %s341, 7
      %s343 = scalar_select %p342, %s341, 7
      %p344 = scmp.lt.s32.totalorder %s24, 0
      %s345 = scalar_select %p344, %s24, 0
      %s346 = sadd.s32 %s345, %s343
      %s347 = smul.addr %s346, 8
      %s348 = scalar_lea.vmem %s6, %s347
      %p349 = pneg %p224
      %p350 = pneg %p221
      %p351 = scmp.lt.s32.totalorder %s24, 0
      %s352 = scalar_select %p351, %s24, 0
      %s353 = smul.addr %s352, 8
      %s354 = scalar_lea.vmem %s7, %s353
      %p355 = pneg %p250
      %p356 = pneg %p247
      %p357 = scmp.lt.s32.totalorder %s24, 0
      %s358 = scalar_select %p357, %s24, 0
      %s359 = smul.addr %s358, 8
      %s360 = scalar_lea.vmem %s8, %s359
      %s361 = smul.u32 4, %s25
      %p362 = scmp.lt.s32.totalorder %s361, 7
      %s363 = scalar_select %p362, %s361, 7
      %p364 = scmp.lt.s32.totalorder %s24, 0
      %s365 = scalar_select %p364, %s24, 0
      %s366 = sadd.s32 %s365, %s363
      %s367 = smul.addr %s366, 8
      %s368 = scalar_lea.vmem %s0, %s367
      %s369 = smul.u32 4, %s25
      %p370 = scmp.lt.s32.totalorder %s24, 0
      %s371 = scalar_select %p370, %s24, 0
      %s372 = smul.addr %s371, 8
      %s373 = scalar_lea.vmem %s4, %s372
      %p374 = scmp.lt.s32.totalorder %s24, 0
      %s375 = scalar_select %p374, %s24, 0
      %s376 = smul.addr %s375, 8
      %s377 = scalar_lea.vmem %s5, %s376
      %s378 = smul.u32 4, %s25
      %p379 = scmp.lt.s32.totalorder %s378, 7
      %s380 = scalar_select %p379, %s378, 7
      %p381 = scmp.lt.s32.totalorder %s24, 0
      %s382 = scalar_select %p381, %s24, 0
      %s383 = sadd.s32 %s382, %s380
      %s384 = smul.addr %s383, 8
      %s385 = scalar_lea.vmem %s6, %s384
      %s386 = smul.u32 4, %s25
      %p387 = scmp.lt.s32.totalorder %s24, 0
      %s388 = scalar_select %p387, %s24, 0
      %s389 = smul.addr %s388, 8
      %s390 = scalar_lea.vmem %s7, %s389
      %p391 = scmp.lt.s32.totalorder %s24, 0
      %s392 = scalar_select %p391, %s24, 0
      %s393 = smul.addr %s392, 8
      %s394 = scalar_lea.vmem %s8, %s393
      %p395 = scmp.eq.s32.totalorder %s25, 0
      // Predicated region
      $region45: #{sentiment_rnn_forward.2} parent=43 // pred_check
        %p396 = pneg %p395
      $region46: #{sentiment_rnn_forward.2} parent=43 // pred_check_branch
        %398 = sbr.rel (%p396) target = $region48
      $region47: #{sentiment_rnn_forward.2} parent=43 // pred_region
        %v399 = vld [vmem:[%s373] sm:$0xff]
        %vm400 = vcmask 261120
        %401 = vst.msk [vmem:[#allocation2] sm:$0xff] %vm400, %v399
        %v402 = vld [vmem:[%s377] sm:$0xff]
        %403 = vst.msk [vmem:[#allocation3] sm:$0xff] %vm400, %v402
      $region48: #{sentiment_rnn_forward.2} parent=43 // pred_fallthru
        _
      %v404 = vld [vmem:[%s368] sm:$0xff]
      %v405 = vld [vmem:[%s368 + $0x8] sm:$0xff]
      %v406 = vld [vmem:[%s368 + $0x10] sm:$0xff]
      %v407 = vld [vmem:[%s368 + $0x18] sm:$0xff]
      %v408 = vld [vmem:[%s1] sm:$0xff]
      %v409 = vld [vmem:[%s1 + $0x8] sm:$0xff]
      %v410 = vld [vmem:[%s1 + $0x10] sm:$0xff]
      %v411 = vld [vmem:[%s1 + $0x18] sm:$0xff]
      %v412 = vld [vmem:[%s3] sm:$0x1]
      %v414 = vlaneseq
      %v415 = vshrl.u32 %v414, 7
      %v416 = vsub.s32 0, %v415
      %v417 = vrot.slane %v412, %v416
      %vm419 = vcmask 261120
      %v421 = vsel %vm419, %v404, 0
      %v424 = vsel %vm419, %v405, 0
      %v427 = vsel %vm419, %v406, 0
      %v430 = vsel %vm419, %v407, 0
      %432 = vmatprep.subr.mxu0 0.0
      %433 = vmatpush1.msra.mxu0 %v408
      %434 = vmatprep.subr.mxu0 0.0
      %435 = vmatpush1.msra.mxu0 %v409
      %436 = vmatprep.subr.mxu0 0.0
      %437 = vmatpush1.msra.mxu0 %v410
      %438 = vmatprep.subr.mxu0 0.0
      %439 = vmatpush1.msra.mxu0 %v411
      %440 = vmatprep.subr.mxu0 0.0
      %441 = vmatpush1.msra.mxu0 0.0
      %442 = vmatprep.subr.mxu0 0.0
      %443 = vmatpush1.msra.mxu0 0.0
      %444 = vmatprep.subr.mxu0 0.0
      %445 = vmatpush1.msra.mxu0 0.0
      %446 = vmatprep.subr.mxu0 0.0
      %447 = vmatpush1.msra.mxu0 0.0
      %448 = vmatprep.subr.mxu0 0.0
      %449 = vmatpush1.msra.mxu0 0.0
      %450 = vmatprep.subr.mxu0 0.0
      %451 = vmatpush1.msra.mxu0 0.0
      %452 = vmatprep.subr.mxu0 0.0
      %453 = vmatpush1.msra.mxu0 0.0
      %454 = vmatprep.subr.mxu0 0.0
      %455 = vmatpush1.msra.mxu0 0.0
      %456 = vmatprep.subr.mxu0 0.0
      %457 = vmatpush1.msra.mxu0 0.0
      %458 = vmatprep.subr.mxu0 0.0
      %459 = vmatpush1.msra.mxu0 0.0
      %460 = vmatprep.subr.mxu0 0.0
      %461 = vmatpush1.msra.mxu0 0.0
      %462 = vmatprep.subr.mxu0 0.0
      %463 = vmatpush1.msra.mxu0 0.0
      %464 = vmatprep.subr.mxu0 0.0
      %465 = vmatpush1.msra.mxu0 0.0
      %466 = vmatprep.subr.mxu0 0.0
      %467 = vmatpush1.msra.mxu0 0.0
      %468 = vmatprep.subr.mxu0 0.0
      %469 = vmatpush1.msra.mxu0 0.0
      %470 = vmatprep.subr.mxu0 0.0
      %471 = vmatpush1.msra.mxu0 0.0
      %472 = vmatprep.subr.mxu0 0.0
      %473 = vmatpush1.msra.mxu0 0.0
      %474 = vmatprep.subr.mxu0 0.0
      %475 = vmatpush1.msra.mxu0 0.0
      %476 = vmatprep.subr.mxu0 0.0
      %477 = vmatpush1.msra.mxu0 0.0
      %478 = vmatprep.subr.mxu0 0.0
      %479 = vmatpush1.msra.mxu0 0.0
      %480 = vmatprep.subr.mxu0 0.0
      %481 = vmatpush1.msra.mxu0 0.0
      %482 = vmatprep.subr.mxu0 0.0
      %483 = vmatpush1.msra.mxu0 0.0
      %484 = vmatprep.subr.mxu0 0.0
      %485 = vmatpush1.msra.mxu0 0.0
      %486 = vmatprep.subr.mxu0 0.0
      %487 = vmatpush1.msra.mxu0 0.0
      %488 = vmatprep.subr.mxu0 0.0
      %489 = vmatpush1.msra.mxu0 0.0
      %490 = vmatprep.subr.mxu0 0.0
      %491 = vmatpush1.msra.mxu0 0.0
      %492 = vmatprep.subr.mxu0 0.0
      %493 = vmatpush1.msra.mxu0 0.0
      %494 = vmatprep.subr.mxu0 0.0
      %495 = vmatpush1.msra.mxu0 0.0
      %496 = vmatprep.mubr.f32.mxu0 0.0
      %497 = vmatmul.mubr.f32.gmra.mrb[0].mxu0 %v421
      %v498 = vpop.f32.mrb[0].mxu0
      %v499 = vadd.f32 %v417, %v498
      %v500 = vpop.f32.mrb[0].mxu0
      %501 = vmatprep.mubr.f32.mxu0 0.0
      %502 = vmatmul.mubr.f32.gmra.mrb[0].mxu0 %v424
      %v503 = vpop.f32.mrb[0].mxu0
      %v504 = vadd.f32 %v417, %v503
      %v505 = vpop.f32.mrb[0].mxu0
      %506 = vmatprep.mubr.f32.mxu0 0.0
      %507 = vmatmul.mubr.f32.gmra.mrb[0].mxu0 %v427
      %v508 = vpop.f32.mrb[0].mxu0
      %v509 = vadd.f32 %v417, %v508
      %v510 = vpop.f32.mrb[0].mxu0
      %511 = vmatprep.mubr.f32.mxu0 0.0
      %512 = vmatmul.mubr.f32.gmra.mrb[0].mxu0 %v430
      %v513 = vpop.f32.mrb[0].mxu0
      %v514 = vadd.f32 %v417, %v513
      %v515 = vpop.f32.mrb[0].mxu0
      %516 = vdwg.mxu0
      %517 = vst [vmem:[#allocation4] sm:$0xff] %v499
      %518 = vst [vmem:[#allocation4 + $0x8] sm:$0xff] %v504
      %519 = vst [vmem:[#allocation4 + $0x10] sm:$0xff] %v509
      %520 = vst [vmem:[#allocation4 + $0x18] sm:$0xff] %v514
      %v521 = vld [vmem:[%s2] sm:$0xff]
      %v522 = vld [vmem:[%s2 + $0x8] sm:$0xff]
      %v523 = vld [vmem:[%s2 + $0x10] sm:$0xff]
      %v524 = vld [vmem:[%s2 + $0x18] sm:$0xff]
      %v525 = vld [vmem:[#allocation2] sm:$0xff]
      %v526 = vld [vmem:[#allocation3] sm:$0xff]
      %v527 = vld [vmem:[#allocation4] sm:$0xff]
      %v529 = vsel %vm419, %v525, 0
      %531 = vmatprep.subr.mxu0 0.0
      %532 = vmatpush1.msra.mxu0 %v521
      %533 = vmatprep.subr.mxu0 0.0
      %534 = vmatpush1.msra.mxu0 %v522
      %535 = vmatprep.subr.mxu0 0.0
      %536 = vmatpush1.msra.mxu0 %v523
      %537 = vmatprep.subr.mxu0 0.0
      %538 = vmatpush1.msra.mxu0 %v524
      %539 = vmatprep.subr.mxu0 0.0
      %540 = vmatpush1.msra.mxu0 0.0
      %541 = vmatprep.subr.mxu0 0.0
      %542 = vmatpush1.msra.mxu0 0.0
      %543 = vmatprep.subr.mxu0 0.0
      %544 = vmatpush1.msra.mxu0 0.0
      %545 = vmatprep.subr.mxu0 0.0
      %546 = vmatpush1.msra.mxu0 0.0
      %547 = vmatprep.subr.mxu0 0.0
      %548 = vmatpush1.msra.mxu0 0.0
      %549 = vmatprep.subr.mxu0 0.0
      %550 = vmatpush1.msra.mxu0 0.0
      %551 = vmatprep.subr.mxu0 0.0
      %552 = vmatpush1.msra.mxu0 0.0
      %553 = vmatprep.subr.mxu0 0.0
      %554 = vmatpush1.msra.mxu0 0.0
      %555 = vmatprep.subr.mxu0 0.0
      %556 = vmatpush1.msra.mxu0 0.0
      %557 = vmatprep.subr.mxu0 0.0
      %558 = vmatpush1.msra.mxu0 0.0
      %559 = vmatprep.subr.mxu0 0.0
      %560 = vmatpush1.msra.mxu0 0.0
      %561 = vmatprep.subr.mxu0 0.0
      %562 = vmatpush1.msra.mxu0 0.0
      %563 = vmatprep.subr.mxu0 0.0
      %564 = vmatpush1.msra.mxu0 0.0
      %565 = vmatprep.subr.mxu0 0.0
      %566 = vmatpush1.msra.mxu0 0.0
      %567 = vmatprep.subr.mxu0 0.0
      %568 = vmatpush1.msra.mxu0 0.0
      %569 = vmatprep.subr.mxu0 0.0
      %570 = vmatpush1.msra.mxu0 0.0
      %571 = vmatprep.subr.mxu0 0.0
      %572 = vmatpush1.msra.mxu0 0.0
      %573 = vmatprep.subr.mxu0 0.0
      %574 = vmatpush1.msra.mxu0 0.0
      %575 = vmatprep.subr.mxu0 0.0
      %576 = vmatpush1.msra.mxu0 0.0
      %577 = vmatprep.subr.mxu0 0.0
      %578 = vmatpush1.msra.mxu0 0.0
      %579 = vmatprep.subr.mxu0 0.0
      %580 = vmatpush1.msra.mxu0 0.0
      %581 = vmatprep.subr.mxu0 0.0
      %582 = vmatpush1.msra.mxu0 0.0
      %583 = vmatprep.subr.mxu0 0.0
      %584 = vmatpush1.msra.mxu0 0.0
      %585 = vmatprep.subr.mxu0 0.0
      %586 = vmatpush1.msra.mxu0 0.0
      %587 = vmatprep.subr.mxu0 0.0
      %588 = vmatpush1.msra.mxu0 0.0
      %589 = vmatprep.subr.mxu0 0.0
      %590 = vmatpush1.msra.mxu0 0.0
      %591 = vmatprep.subr.mxu0 0.0
      %592 = vmatpush1.msra.mxu0 0.0
      %593 = vmatprep.subr.mxu0 0.0
      %594 = vmatpush1.msra.mxu0 0.0
      %595 = vmatprep.mubr.f32.mxu0 0.0
      %596 = vmatmul.mubr.f32.gmra.mrb[0].mxu0 %v529
      %v597 = vpop.f32.mrb[0].mxu0
      %v598 = vadd.f32 0.0, %v597
      %v599 = vpop.f32.mrb[0].mxu0
      %600 = vdwg.mxu0
      %v601 = vadd.f32 %v527, %v598
      %v602 = vxor.u32 %v601, 2147483648
      %v603 = vmul.f32 %v602, 1.442695
      %v604 = vpow.pop %v603
      %v605 = vadd.f32 %v604, 1.0
      %v606 = vrcp.pop %v605
      %v607 = vmul.f32 1.0, %v606
      %v608 = vtanh.pop %v601
      %610 = vrot.lane.b32.xlu0 %v526, 32
      %v611 = vpop.permute.xlu0 %610
      %v613 = vmul.f32 %v607, %v611
      %615 = vrot.lane.b32.xlu0 %v608, 64
      %v616 = vpop.permute.xlu0 %615
      %v618 = vmul.f32 %v607, %v616
      %620 = vrot.lane.b32.xlu0 %v618, 32
      %v621 = vpop.permute.xlu0 %620
      %v623 = vadd.f32 %v613, %v621
      %v624 = vtanh.pop %v623
      %626 = vrot.lane.b32.xlu0 %v624, 64
      %v627 = vpop.permute.xlu0 %626
      %v629 = vmul.f32 %v607, %v627
      %631 = vrot.lane.b32.xlu0 %v629, 32
      %v632 = vpop.permute.xlu0 %631
      %634 = vst.msk [vmem:[%s385] sm:$0xff] %vm419, %v632
      %s635 = scalar_lea.vmem [#allocation4], 8
      %v636 = vld [vmem:[%s635] sm:$0xff]
      %v637 = vsel %vm419, %v632, 0
      %639 = vmatprep.subr.mxu0 0.0
      %640 = vmatpush1.msra.mxu0 %v521
      %641 = vmatprep.subr.mxu0 0.0
      %642 = vmatpush1.msra.mxu0 %v522
      %643 = vmatprep.subr.mxu0 0.0
      %644 = vmatpush1.msra.mxu0 %v523
      %645 = vmatprep.subr.mxu0 0.0
      %646 = vmatpush1.msra.mxu0 %v524
      %647 = vmatprep.subr.mxu0 0.0
      %648 = vmatpush1.msra.mxu0 0.0
      %649 = vmatprep.subr.mxu0 0.0
      %650 = vmatpush1.msra.mxu0 0.0
      %651 = vmatprep.subr.mxu0 0.0
      %652 = vmatpush1.msra.mxu0 0.0
      %653 = vmatprep.subr.mxu0 0.0
      %654 = vmatpush1.msra.mxu0 0.0
      %655 = vmatprep.subr.mxu0 0.0
      %656 = vmatpush1.msra.mxu0 0.0
      %657 = vmatprep.subr.mxu0 0.0
      %658 = vmatpush1.msra.mxu0 0.0
      %659 = vmatprep.subr.mxu0 0.0
      %660 = vmatpush1.msra.mxu0 0.0
      %661 = vmatprep.subr.mxu0 0.0
      %662 = vmatpush1.msra.mxu0 0.0
      %663 = vmatprep.subr.mxu0 0.0
      %664 = vmatpush1.msra.mxu0 0.0
      %665 = vmatprep.subr.mxu0 0.0
      %666 = vmatpush1.msra.mxu0 0.0
      %667 = vmatprep.subr.mxu0 0.0
      %668 = vmatpush1.msra.mxu0 0.0
      %669 = vmatprep.subr.mxu0 0.0
      %670 = vmatpush1.msra.mxu0 0.0
      %671 = vmatprep.subr.mxu0 0.0
      %672 = vmatpush1.msra.mxu0 0.0
      %673 = vmatprep.subr.mxu0 0.0
      %674 = vmatpush1.msra.mxu0 0.0
      %675 = vmatprep.subr.mxu0 0.0
      %676 = vmatpush1.msra.mxu0 0.0
      %677 = vmatprep.subr.mxu0 0.0
      %678 = vmatpush1.msra.mxu0 0.0
      %679 = vmatprep.subr.mxu0 0.0
      %680 = vmatpush1.msra.mxu0 0.0
      %681 = vmatprep.subr.mxu0 0.0
      %682 = vmatpush1.msra.mxu0 0.0
      %683 = vmatprep.subr.mxu0 0.0
      %684 = vmatpush1.msra.mxu0 0.0
      %685 = vmatprep.subr.mxu0 0.0
      %686 = vmatpush1.msra.mxu0 0.0
      %687 = vmatprep.subr.mxu0 0.0
      %688 = vmatpush1.msra.mxu0 0.0
      %689 = vmatprep.subr.mxu0 0.0
      %690 = vmatpush1.msra.mxu0 0.0
      %691 = vmatprep.subr.mxu0 0.0
      %692 = vmatpush1.msra.mxu0 0.0
      %693 = vmatprep.subr.mxu0 0.0
      %694 = vmatpush1.msra.mxu0 0.0
      %695 = vmatprep.subr.mxu0 0.0
      %696 = vmatpush1.msra.mxu0 0.0
      %697 = vmatprep.subr.mxu0 0.0
      %698 = vmatpush1.msra.mxu0 0.0
      %699 = vmatprep.subr.mxu0 0.0
      %700 = vmatpush1.msra.mxu0 0.0
      %701 = vmatprep.subr.mxu0 0.0
      %702 = vmatpush1.msra.mxu0 0.0
      %703 = vmatprep.mubr.f32.mxu0 0.0
      %704 = vmatmul.mubr.f32.gmra.mrb[0].mxu0 %v637
      %v705 = vpop.f32.mrb[0].mxu0
      %v706 = vadd.f32 0.0, %v705
      %v707 = vpop.f32.mrb[0].mxu0
      %708 = vdwg.mxu0
      %v709 = vadd.f32 %v636, %v706
      %v710 = vxor.u32 %v709, 2147483648
      %v711 = vmul.f32 %v710, 1.442695
      %v712 = vpow.pop %v711
      %v713 = vadd.f32 %v712, 1.0
      %v714 = vrcp.pop %v713
      %v715 = vmul.f32 1.0, %v714
      %v716 = vtanh.pop %v709
      %v717 = vmul.f32 %v715, %v623
      %719 = vrot.lane.b32.xlu0 %v716, 64
      %v720 = vpop.permute.xlu0 %719
      %v722 = vmul.f32 %v715, %v720
      %724 = vrot.lane.b32.xlu0 %v722, 32
      %v725 = vpop.permute.xlu0 %724
      %v727 = vadd.f32 %v717, %v725
      %v728 = vtanh.pop %v727
      %730 = vrot.lane.b32.xlu0 %v728, 64
      %v731 = vpop.permute.xlu0 %730
      %v733 = vmul.f32 %v715, %v731
      %735 = vrot.lane.b32.xlu0 %v733, 32
      %v736 = vpop.permute.xlu0 %735
      %s738 = scalar_lea.vmem %s385, 8
      %739 = vst.msk [vmem:[%s738] sm:$0xff] %vm419, %v736
      %s740 = scalar_lea.vmem [#allocation4], 16
      %v741 = vld [vmem:[%s740] sm:$0xff]
      %v742 = vsel %vm419, %v736, 0
      %744 = vmatprep.subr.mxu0 0.0
      %745 = vmatpush1.msra.mxu0 %v521
      %746 = vmatprep.subr.mxu0 0.0
      %747 = vmatpush1.msra.mxu0 %v522
      %748 = vmatprep.subr.mxu0 0.0
      %749 = vmatpush1.msra.mxu0 %v523
      %750 = vmatprep.subr.mxu0 0.0
      %751 = vmatpush1.msra.mxu0 %v524
      %752 = vmatprep.subr.mxu0 0.0
      %753 = vmatpush1.msra.mxu0 0.0
      %754 = vmatprep.subr.mxu0 0.0
      %755 = vmatpush1.msra.mxu0 0.0
      %756 = vmatprep.subr.mxu0 0.0
      %757 = vmatpush1.msra.mxu0 0.0
      %758 = vmatprep.subr.mxu0 0.0
      %759 = vmatpush1.msra.mxu0 0.0
      %760 = vmatprep.subr.mxu0 0.0
      %761 = vmatpush1.msra.mxu0 0.0
      %762 = vmatprep.subr.mxu0 0.0
      %763 = vmatpush1.msra.mxu0 0.0
      %764 = vmatprep.subr.mxu0 0.0
      %765 = vmatpush1.msra.mxu0 0.0
      %766 = vmatprep.subr.mxu0 0.0
      %767 = vmatpush1.msra.mxu0 0.0
      %768 = vmatprep.subr.mxu0 0.0
      %769 = vmatpush1.msra.mxu0 0.0
      %770 = vmatprep.subr.mxu0 0.0
      %771 = vmatpush1.msra.mxu0 0.0
      %772 = vmatprep.subr.mxu0 0.0
      %773 = vmatpush1.msra.mxu0 0.0
      %774 = vmatprep.subr.mxu0 0.0
      %775 = vmatpush1.msra.mxu0 0.0
      %776 = vmatprep.subr.mxu0 0.0
      %777 = vmatpush1.msra.mxu0 0.0
      %778 = vmatprep.subr.mxu0 0.0
      %779 = vmatpush1.msra.mxu0 0.0
      %780 = vmatprep.subr.mxu0 0.0
      %781 = vmatpush1.msra.mxu0 0.0
      %782 = vmatprep.subr.mxu0 0.0
      %783 = vmatpush1.msra.mxu0 0.0
      %784 = vmatprep.subr.mxu0 0.0
      %785 = vmatpush1.msra.mxu0 0.0
      %786 = vmatprep.subr.mxu0 0.0
      %787 = vmatpush1.msra.mxu0 0.0
      %788 = vmatprep.subr.mxu0 0.0
      %789 = vmatpush1.msra.mxu0 0.0
      %790 = vmatprep.subr.mxu0 0.0
      %791 = vmatpush1.msra.mxu0 0.0
      %792 = vmatprep.subr.mxu0 0.0
      %793 = vmatpush1.msra.mxu0 0.0
      %794 = vmatprep.subr.mxu0 0.0
      %795 = vmatpush1.msra.mxu0 0.0
      %796 = vmatprep.subr.mxu0 0.0
      %797 = vmatpush1.msra.mxu0 0.0
      %798 = vmatprep.subr.mxu0 0.0
      %799 = vmatpush1.msra.mxu0 0.0
      %800 = vmatprep.subr.mxu0 0.0
      %801 = vmatpush1.msra.mxu0 0.0
      %802 = vmatprep.subr.mxu0 0.0
      %803 = vmatpush1.msra.mxu0 0.0
      %804 = vmatprep.subr.mxu0 0.0
      %805 = vmatpush1.msra.mxu0 0.0
      %806 = vmatprep.subr.mxu0 0.0
      %807 = vmatpush1.msra.mxu0 0.0
      %808 = vmatprep.mubr.f32.mxu0 0.0
      %809 = vmatmul.mubr.f32.gmra.mrb[0].mxu0 %v742
      %v810 = vpop.f32.mrb[0].mxu0
      %v811 = vadd.f32 0.0, %v810
      %v812 = vpop.f32.mrb[0].mxu0
      %813 = vdwg.mxu0
      %v814 = vadd.f32 %v741, %v811
      %v815 = vxor.u32 %v814, 2147483648
      %v816 = vmul.f32 %v815, 1.442695
      %v817 = vpow.pop %v816
      %v818 = vadd.f32 %v817, 1.0
      %v819 = vrcp.pop %v818
      %v820 = vmul.f32 1.0, %v819
      %v821 = vtanh.pop %v814
      %v822 = vmul.f32 %v820, %v727
      %824 = vrot.lane.b32.xlu0 %v821, 64
      %v825 = vpop.permute.xlu0 %824
      %v827 = vmul.f32 %v820, %v825
      %829 = vrot.lane.b32.xlu0 %v827, 32
      %v830 = vpop.permute.xlu0 %829
      %v832 = vadd.f32 %v822, %v830
      %v833 = vtanh.pop %v832
      %835 = vrot.lane.b32.xlu0 %v833, 64
      %v836 = vpop.permute.xlu0 %835
      %v838 = vmul.f32 %v820, %v836
      %840 = vrot.lane.b32.xlu0 %v838, 32
      %v841 = vpop.permute.xlu0 %840
      %s843 = scalar_lea.vmem %s385, 16
      %844 = vst.msk [vmem:[%s843] sm:$0xff] %vm419, %v841
      %s845 = scalar_lea.vmem [#allocation4], 24
      %v846 = vld [vmem:[%s845] sm:$0xff]
      %v847 = vsel %vm419, %v841, 0
      %849 = vmatprep.subr.mxu0 0.0
      %850 = vmatpush1.msra.mxu0 %v521
      %851 = vmatprep.subr.mxu0 0.0
      %852 = vmatpush1.msra.mxu0 %v522
      %853 = vmatprep.subr.mxu0 0.0
      %854 = vmatpush1.msra.mxu0 %v523
      %855 = vmatprep.subr.mxu0 0.0
      %856 = vmatpush1.msra.mxu0 %v524
      %857 = vmatprep.subr.mxu0 0.0
      %858 = vmatpush1.msra.mxu0 0.0
      %859 = vmatprep.subr.mxu0 0.0
      %860 = vmatpush1.msra.mxu0 0.0
      %861 = vmatprep.subr.mxu0 0.0
      %862 = vmatpush1.msra.mxu0 0.0
      %863 = vmatprep.subr.mxu0 0.0
      %864 = vmatpush1.msra.mxu0 0.0
      %865 = vmatprep.subr.mxu0 0.0
      %866 = vmatpush1.msra.mxu0 0.0
      %867 = vmatprep.subr.mxu0 0.0
      %868 = vmatpush1.msra.mxu0 0.0
      %869 = vmatprep.subr.mxu0 0.0
      %870 = vmatpush1.msra.mxu0 0.0
      %871 = vmatprep.subr.mxu0 0.0
      %872 = vmatpush1.msra.mxu0 0.0
      %873 = vmatprep.subr.mxu0 0.0
      %874 = vmatpush1.msra.mxu0 0.0
      %875 = vmatprep.subr.mxu0 0.0
      %876 = vmatpush1.msra.mxu0 0.0
      %877 = vmatprep.subr.mxu0 0.0
      %878 = vmatpush1.msra.mxu0 0.0
      %879 = vmatprep.subr.mxu0 0.0
      %880 = vmatpush1.msra.mxu0 0.0
      %881 = vmatprep.subr.mxu0 0.0
      %882 = vmatpush1.msra.mxu0 0.0
      %883 = vmatprep.subr.mxu0 0.0
      %884 = vmatpush1.msra.mxu0 0.0
      %885 = vmatprep.subr.mxu0 0.0
      %886 = vmatpush1.msra.mxu0 0.0
      %887 = vmatprep.subr.mxu0 0.0
      %888 = vmatpush1.msra.mxu0 0.0
      %889 = vmatprep.subr.mxu0 0.0
      %890 = vmatpush1.msra.mxu0 0.0
      %891 = vmatprep.subr.mxu0 0.0
      %892 = vmatpush1.msra.mxu0 0.0
      %893 = vmatprep.subr.mxu0 0.0
      %894 = vmatpush1.msra.mxu0 0.0
      %895 = vmatprep.subr.mxu0 0.0
      %896 = vmatpush1.msra.mxu0 0.0
      %897 = vmatprep.subr.mxu0 0.0
      %898 = vmatpush1.msra.mxu0 0.0
      %899 = vmatprep.subr.mxu0 0.0
      %900 = vmatpush1.msra.mxu0 0.0
      %901 = vmatprep.subr.mxu0 0.0
      %902 = vmatpush1.msra.mxu0 0.0
      %903 = vmatprep.subr.mxu0 0.0
      %904 = vmatpush1.msra.mxu0 0.0
      %905 = vmatprep.subr.mxu0 0.0
      %906 = vmatpush1.msra.mxu0 0.0
      %907 = vmatprep.subr.mxu0 0.0
      %908 = vmatpush1.msra.mxu0 0.0
      %909 = vmatprep.subr.mxu0 0.0
      %910 = vmatpush1.msra.mxu0 0.0
      %911 = vmatprep.subr.mxu0 0.0
      %912 = vmatpush1.msra.mxu0 0.0
      %913 = vmatprep.mubr.f32.mxu0 0.0
      %914 = vmatmul.mubr.f32.gmra.mrb[0].mxu0 %v847
      %v915 = vpop.f32.mrb[0].mxu0
      %v916 = vadd.f32 0.0, %v915
      %v917 = vpop.f32.mrb[0].mxu0
      %918 = vdwg.mxu0
      %v919 = vadd.f32 %v846, %v916
      %v920 = vxor.u32 %v919, 2147483648
      %v921 = vmul.f32 %v920, 1.442695
      %v922 = vpow.pop %v921
      %v923 = vadd.f32 %v922, 1.0
      %v924 = vrcp.pop %v923
      %v925 = vmul.f32 1.0, %v924
      %v926 = vtanh.pop %v919
      %v927 = vmul.f32 %v925, %v832
      %929 = vrot.lane.b32.xlu0 %v926, 64
      %v930 = vpop.permute.xlu0 %929
      %v932 = vmul.f32 %v925, %v930
      %934 = vrot.lane.b32.xlu0 %v932, 32
      %v935 = vpop.permute.xlu0 %934
      %v937 = vadd.f32 %v927, %v935
      %v938 = vtanh.pop %v937
      %940 = vrot.lane.b32.xlu0 %v938, 64
      %v941 = vpop.permute.xlu0 %940
      %v943 = vmul.f32 %v925, %v941
      %945 = vrot.lane.b32.xlu0 %v943, 32
      %v946 = vpop.permute.xlu0 %945
      %s948 = scalar_lea.vmem %s385, 24
      %949 = vst.msk [vmem:[%s948] sm:$0xff] %vm419, %v946
      %950 = vst.msk [vmem:[#allocation2] sm:$0xff] %vm419, %v946
      %952 = vrot.lane.b32.xlu0 %v937, 96
      %v953 = vpop.permute.xlu0 %952
      %955 = vst.msk [vmem:[#allocation3] sm:$0xff] %vm419, %v953
      %p956 = scmp.eq.s32.totalorder %s25, 1
      // Predicated region
      $region49: #{sentiment_rnn_forward.2} parent=43 // pred_check
        %p957 = pneg %p956
      $region50: #{sentiment_rnn_forward.2} parent=43 // pred_check_branch
        %959 = sbr.rel (%p957) target = $region52
      $region51: #{sentiment_rnn_forward.2} parent=43 // pred_region
        %960 = vst.msk [vmem:[%s390] sm:$0xff] %vm419, %v946
        %961 = vst.msk [vmem:[%s394] sm:$0xff] %vm419, %v953
      $region52: #{sentiment_rnn_forward.2} parent=43 // pred_fallthru
        _
      %s962 = smul.u32 4, %s25
      %p963 = scmp.lt.s32.totalorder %s962, 7
      %s964 = scalar_select %p963, %s962, 7
      %p965 = scmp.lt.s32.totalorder %s24, 0
      %s966 = scalar_select %p965, %s24, 0
      %s967 = sadd.s32 %s966, %s964
      %s968 = smul.addr %s967, 8
      %s969 = scalar_lea.vmem %s6, %s968
      %p970 = scmp.lt.s32.totalorder %s24, 0
      %s971 = scalar_select %p970, %s24, 0
      %s972 = smul.addr %s971, 8
      %s973 = scalar_lea.vmem %s7, %s972
      %p974 = scmp.lt.s32.totalorder %s24, 0
      %s975 = scalar_select %p974, %s24, 0
      %s976 = smul.addr %s975, 8
      %s977 = scalar_lea.vmem %s8, %s976
      // Predicated region
      $region53: #{sentiment_rnn_forward.2} parent=43 // pred_check
        %p978 = pneg %p195
      $region54: #{sentiment_rnn_forward.2} parent=43 // pred_check_branch
        %980 = sbr.rel (%p978) target = $region56
      $region55: #{sentiment_rnn_forward.2} parent=43 // pred_region
        %s981 = smul.u32 4, %s25
      $region56: #{sentiment_rnn_forward.2} parent=43 // pred_fallthru
        _
      // Predicated region
      $region57: #{sentiment_rnn_forward.2} parent=43 // pred_check
        %p982 = pneg %p221
      $region58: #{sentiment_rnn_forward.2} parent=43 // pred_check_branch
        %984 = sbr.rel (%p982) target = $region60
      $region59: #{sentiment_rnn_forward.2} parent=43 // pred_region
        _
      $region60: #{sentiment_rnn_forward.2} parent=43 // pred_fallthru
        _
      // Predicated region
      $region61: #{sentiment_rnn_forward.2} parent=43 // pred_check
        %p985 = pneg %p247
      $region62: #{sentiment_rnn_forward.2} parent=43 // pred_check_branch
        %987 = sbr.rel (%p985) target = $region64
      $region63: #{sentiment_rnn_forward.2} parent=43 // pred_region
        _
      $region64: #{sentiment_rnn_forward.2} parent=43 // pred_fallthru
        _
      // Predicated region
      $region65: #{sentiment_rnn_forward.2} parent=43 // pred_check
        %p988 = pneg %p221
      $region66: #{sentiment_rnn_forward.2} parent=43 // pred_check_branch
        %990 = sbr.rel (%p988) target = $region68
      $region67: #{sentiment_rnn_forward.2} parent=43 // pred_region
        %p991 = scmp.lt.s32.totalorder %s24, 0
        %s992 = scalar_select %p991, %s24, 0
        %s993 = smul.addr %s992, 8
        %s994 = scalar_lea.vmem %s7, %s993
      $region68: #{sentiment_rnn_forward.2} parent=43 // pred_fallthru
        _
      // Predicated region
      $region69: #{sentiment_rnn_forward.2} parent=43 // pred_check
        %p995 = pneg %p247
      $region70: #{sentiment_rnn_forward.2} parent=43 // pred_check_branch
        %997 = sbr.rel (%p995) target = $region72
      $region71: #{sentiment_rnn_forward.2} parent=43 // pred_region
        %p998 = scmp.lt.s32.totalorder %s24, 0
        %s999 = scalar_select %p998, %s24, 0
        %s1000 = smul.addr %s999, 8
        %s1001 = scalar_lea.vmem %s8, %s1000
      $region72: #{sentiment_rnn_forward.2} parent=43 // pred_fallthru
        _
    $region44: #{sentiment_rnn_forward.2} parent=5 // pred_fallthru
      _
    %p1002 = scmp.le.s32.totalorder 2, %s15
    // Predicated region
    $region73: #{sentiment_rnn_forward.2} parent=5 // pred_check
      %p1003 = pneg %p1002
    $region74: #{sentiment_rnn_forward.2} parent=5 // pred_check_branch
      %1005 = sbr.rel (%p1003) target = $region76
    $region75: #{sentiment_rnn_forward.2} parent=5 // pred_region
      %s1006 = ssub.s32 %s15, 2
      // Predicated region
      $region77: #{sentiment_rnn_forward.2} parent=75 // pred_check
        %p1007 = pneg %p201
      $region78: #{sentiment_rnn_forward.2} parent=75 // pred_check_branch
        %1009 = sbr.rel (%p1007) target = $region80
      $region79: #{sentiment_rnn_forward.2} parent=75 // pred_region
        %s1010 = smul.u32 4, %s27
        %p1011 = scmp.lt.s32.totalorder %s1010, 7
        %s1012 = scalar_select %p1011, %s1010, 7
        %p1013 = scmp.lt.s32.totalorder %s26, 0
        %s1014 = scalar_select %p1013, %s26, 0
        %s1015 = sadd.s32 %s1014, %s1012
        %s1016 = smul.addr %s1015, 8
        %s1017 = scalar_lea.vmem %s6, %s1016
      $region80: #{sentiment_rnn_forward.2} parent=75 // pred_fallthru
        _
    $region76: #{sentiment_rnn_forward.2} parent=5 // pred_fallthru
      _
  $region6: #{sentiment_rnn_forward.2} parent=0 // loop_footer
    %s19 = sadd.s32 1, %s15
  $region7: #{sentiment_rnn_forward.2} parent=0 // loop_footer_branch
    %14 = sbr.rel target = $region3
  $region8: #{sentiment_rnn_forward.2} parent=0 // loop_exit
    _

</llo_original>
